<compile_context>
chip_gen: v5e
topology: v5e:2x2
jax: 0.10.0
libtpu: 0.0.40
codegen_flags: <defaults>
</compile_context>

<pallas_src>
import functools

import numpy as np

import jax
import jax.numpy as jnp
from jax.experimental import pallas as pl
from jax.experimental.pallas import tpu as pltpu

K_HOPS = 3            # TAGConv default K
_PAD_GRAIN = 256      # node-count padding granularity (MXU / lane aligned)
_MAX_TK = 2048        # contraction-tile cap: 512x2048 bf16 A tile = 2 MiB/step
_MAX_TM = 512         # row-tile cap for large graphs


def _round_up(x, m):
    return ((x + m - 1) // m) * m


def _choose_tiles(n_pad):
    """Pick (tm, tk): multiples of _PAD_GRAIN that divide n_pad.

    tk (contraction axis) is pushed towards 2048 so that large graphs stream
    >= 1-2 MiB of bf16 A per grid step (amortizing the ~0.35us per-step
    overhead on v6e/v7x); small graphs collapse to a single tile.
    """
    def largest_div(limit):
        best = _PAD_GRAIN
        d = _PAD_GRAIN
        while d <= min(limit, n_pad):
            if n_pad % d == 0:
                best = d
            d += _PAD_GRAIN
        return best

    tm = largest_div(n_pad if n_pad <= 1024 else _MAX_TM)
    tk = largest_div(_MAX_TK)
    return tm, tk


def _vmem_limit_bytes(requested):
    cap = 64 * 1024 * 1024                      # conservative default (v7x per-core)
    try:
        cap = int(pltpu.get_tpu_info().vmem_capacity_bytes)
    except Exception:
        pass
    return int(min(cap - 2 * 1024 * 1024, max(32 * 1024 * 1024, 2 * requested)))


# ---------------------------------------------------------------------------
# gcn_norm (PyG, improved=False, add_self_loops=False)
# ---------------------------------------------------------------------------
def _gcn_norm(edge_index, edge_weight, num_nodes):
    row, col = edge_index[0], edge_index[1]          # row = source, col = target
    ew = edge_weight.astype(jnp.float32)
    deg = jnp.zeros((num_nodes,), jnp.float32).at[col].add(ew)
    deg_inv_sqrt = jnp.where(deg > 0, jax.lax.rsqrt(jnp.maximum(deg, 1e-30)), 0.0)
    norm = deg_inv_sqrt[row] * ew * deg_inv_sqrt[col]
    return row, col, norm


def gcn_norm_dense_bf16(edge_index, edge_weight, num_nodes, padded_nodes):
    """Dense A[target, source], scattered directly into a bf16 buffer at the
    padded size (normalization stays in f32).  Padded rows/cols stay zero."""
    row, col, norm = _gcn_norm(edge_index, edge_weight, num_nodes)
    A = jnp.zeros((padded_nodes, padded_nodes), jnp.bfloat16)
    return A.at[col, row].add(norm.astype(jnp.bfloat16))


def _block_structure(edge_index, num_nodes, n_pad, tm, tk):
    """Per-row-tile lists of nonzero column tiles of A (scalar-prefetch
    metadata for block-sparse streaming).  Falls back to the dense schedule
    when edge_index is a tracer (e.g. under jit)."""
    row_tiles = n_pad // tm
    k_tiles = n_pad // tk
    try:
        ei = np.asarray(edge_index)
        mask = np.zeros((row_tiles, k_tiles), dtype=bool)
        # A[target, source]: row tile = target // tm, col tile = source // tk.
        mask[np.asarray(ei[1]) // tm, np.asarray(ei[0]) // tk] = True
    except Exception:                      # traced -> dense schedule (still correct)
        mask = np.ones((row_tiles, k_tiles), dtype=bool)
    counts = mask.sum(axis=1).astype(np.int32)
    max_nnz = max(int(counts.max()), 1)
    cols = np.zeros((row_tiles, max_nnz), dtype=np.int32)
    for r in range(row_tiles):
        nz = np.nonzero(mask[r])[0]
        if nz.size:
            cols[r, :nz.size] = nz
            cols[r, nz.size:] = nz[-1]     # repeat last -> no extra DMA on pad steps
    return jnp.asarray(counts), jnp.asarray(cols.reshape(-1)), max_nnz


# ---------------------------------------------------------------------------
# Fused TAGConv propagation kernel: all hops of  z <- A @ z + c[hop]  in one
# pallas_call, with a resident bf16 ping-pong buffer for z and block-sparse,
# scalar-prefetch-driven streaming of A.
# ---------------------------------------------------------------------------
def _tag_prop_kernel(cnt_ref, col_ref, params_ref, a_ref, h0_ref, c_ref, o_ref,
                     acc_ref, hbuf_ref, *, epilogue, n_pad, tm, tk, max_nnz):
    hop = pl.program_id(0)
    i = pl.program_id(1)
    k = pl.program_id(2)
    n_hops = pl.num_programs(0)
    nk = pl.num_programs(2)

    cur = hop % 2                          # ping-pong slot holding this hop's operand

    @pl.when((hop == 0) & (i == 0) & (k == 0))
    def _seed():
        # Load the hop-0 propagated operand into slot 0 once.
        hbuf_ref[pl.ds(0, n_pad), :] = h0_ref[...]

    @pl.when(k == 0)
    def _init():
        acc_ref[...] = c_ref[0]

    @pl.when(k < cnt_ref[i])               # skip all-zero A blocks entirely
    def _accum():
        j = col_ref[i * max_nnz + k]       # column tile (matches a_ref's fetched tile)
        h_off = pl.multiple_of(cur * n_pad + j * tk, _PAD_GRAIN)
        acc_ref[...] += jnp.dot(a_ref[...], hbuf_ref[pl.ds(h_off, tk), :],
                                preferred_element_type=jnp.float32)

    @pl.when((k == nk - 1) & (hop < n_hops - 1))
    def _stash():
        # Hand this row tile of the hop result to the next hop's operand slot.
        nxt_off = pl.multiple_of((1 - cur) * n_pad + i * tm, _PAD_GRAIN)
        hbuf_ref[pl.ds(nxt_off, tm), :] = acc_ref[...].astype(hbuf_ref.dtype)

    @pl.when(k == nk - 1)
    def _emit():
        y = acc_ref[...]
        if epilogue == "relu":
            y = jnp.maximum(y, 0.0)
        elif epilogue == "affine_sigmoid":
            # endLinear(1x1) as a scalar multiply-add + EUP sigmoid instead of
            # a near-empty MXU pass.
            y = jax.nn.sigmoid(y * params_ref[0] + params_ref[1])
        o_ref[0] = y.astype(o_ref.dtype)   # only the last hop's slab is kept


def _tag_prop_fused(a_bf16, h0, c_stack, counts, cols, max_nnz, *, tm, tk,
                    epilogue="none", params=None):
    n_pad = a_bf16.shape[0]
    n_hops, _, feat = c_stack.shape
    row_tiles = n_pad // tm
    if params is None:
        params = jnp.zeros((2,), jnp.float32)

    grid = (n_hops, row_tiles, max_nnz)

    def a_map(h, i, k, cnt_ref, col_ref):
        return (i, col_ref[i * max_nnz + k])

    def h0_map(h, i, k, cnt_ref, col_ref):
        return (0, 0)

    def c_map(h, i, k, cnt_ref, col_ref):
        return (h, i, 0)

    def o_map(h, i, k, cnt_ref, col_ref):
        return (h, i, 0)

    vmem_bytes = (2 * tm * tk * 2          # A tiles (bf16, double-buffered)
                  + 2 * tm * feat * 4      # c tiles
                  + 2 * tm * feat * 4      # out tiles
                  + 2 * n_pad * feat * 2   # h0 (resident)
                  + tm * feat * 4          # f32 accumulator scratch
                  + 2 * n_pad * feat * 2)  # h ping-pong scratch

    kernel = functools.partial(_tag_prop_kernel, epilogue=epilogue,
                               n_pad=n_pad, tm=tm, tk=tk, max_nnz=max_nnz)

    out = pl.pallas_call(
        kernel,
        out_shape=jax.ShapeDtypeStruct((n_hops, n_pad, feat), jnp.float32),
        grid_spec=pltpu.PrefetchScalarGridSpec(
            num_scalar_prefetch=2,
            grid=grid,
            in_specs=[
                pl.BlockSpec(memory_space=pltpu.MemorySpace.SMEM),   # epilogue params
                pl.BlockSpec((tm, tk), a_map),                       # A tile (bf16)
                pl.BlockSpec((n_pad, feat), h0_map),                 # hop-0 operand
                pl.BlockSpec((1, tm, feat), c_map),                  # Horner add term
            ],
            out_specs=pl.BlockSpec((1, tm, feat), o_map),
            scratch_shapes=[
                pltpu.VMEM((tm, feat), jnp.float32),                 # accumulator
                pltpu.VMEM((2 * n_pad, feat), jnp.bfloat16),         # h ping-pong
            ],
        ),
        compiler_params=pltpu.CompilerParams(
            # hop t+1 needs every row tile of hop t (held in shared VMEM
            # scratch), so all grid axes stay sequential on one core.
            # TODO(synk): on v7x, shard rows across cores with a shared-memory
            # resident h + per-hop core barrier to recover megacore on huge graphs.
            dimension_semantics=("arbitrary", "arbitrary", "arbitrary"),
            vmem_limit_bytes=_vmem_limit_bytes(vmem_bytes),
        ),
    )(counts, cols, params, a_bf16, h0.astype(jnp.bfloat16),
      c_stack.astype(jnp.float32))
    return out[n_hops - 1]


# ---------------------------------------------------------------------------
# Model forward
# ---------------------------------------------------------------------------
def tagnet_forward(x, edge_index, edge_weight, W1, b1, W2, b2, Wl, bl):
    num_nodes = x.shape[0]
    num_classes = Wl.shape[1]
    n_pad = _round_up(max(num_nodes, _PAD_GRAIN), _PAD_GRAIN)
    tm, tk = _choose_tiles(n_pad)

    # TODO(synk): for extremely sparse graphs a CSR / per-edge gather path would
    # beat even block-sparse dense tiles; here A is densified per block.
    A = gcn_norm_dense_bf16(edge_index, edge_weight, num_nodes, n_pad)
    counts, cols, max_nnz = _block_structure(edge_index, num_nodes, n_pad, tm, tk)

    xp = jnp.zeros((n_pad, x.shape[1]), jnp.float32).at[:num_nodes].set(
        x.astype(jnp.float32))

    # Horner form: sum_t (A^t x) W_t = x W_0 + A (x W_1 + A (x W_2 + A (x W_3)));
    # the propagated operand is the lane-wider pre-mixed [Np, F_out]; per-hop
    # weight matmuls degenerate to tiny pre-mixes done as XLA glue.
    def conv(h_in, W, b, epilogue, params=None):
        kk = W.shape[0]
        assert kk >= 2, "TAGConv with K=0 needs no propagation kernel"
        pre = [h_in @ W[t] for t in range(kk)]
        c_stack = jnp.stack([pre[kk - 2 - s] for s in range(kk - 2)] + [pre[0] + b])
        return _tag_prop_fused(A, pre[kk - 1], c_stack, counts, cols, max_nnz,
                               tm=tm, tk=tk, epilogue=epilogue, params=params)

    h = conv(xp, W1, b1, "relu")

    # dropout: module evaluated in eval mode -> identity.
    # TODO(synk): training-mode dropout would use pltpu.prng_seed / prng_random_bits.

    if num_classes == 1:
        params = jnp.stack([Wl[0, 0], bl[0, 0]]).astype(jnp.float32)
        out = conv(h, W2, b2, "affine_sigmoid", params)
    else:
        out = jax.nn.sigmoid(conv(h, W2, b2, "none") @ Wl + bl)

    return out[:num_nodes]


def tagnet_reference(x, edge_index, edge_weight, W1, b1, W2, b2, Wl, bl):
    """Pure-JAX f32 reference for correctness checking."""
    n = x.shape[0]
    row, col, norm = _gcn_norm(edge_index, edge_weight, n)
    A = jnp.zeros((n, n), jnp.float32).at[col, row].add(norm)

    def tagconv(h, W, b):
        out = h @ W[0]
        p = h
        for k in range(1, W.shape[0]):
            p = A @ p
            out = out + p @ W[k]
        return out + b

    h = jnp.maximum(tagconv(x.astype(jnp.float32), W1, b1), 0.0)
    h = tagconv(h, W2, b2)
    return jax.nn.sigmoid(h @ Wl + bl)


if __name__ == "__main__":
    def run_case(num_nodes, num_edges, key, localized_to=None):
        num_node_features = 1
        num_classes = 1
        hidden = 4
        ks = jax.random.split(key, 10)

        x = jax.random.normal(ks[0], (num_nodes, num_node_features), jnp.float32)
        dst_hi = localized_to if localized_to is not None else num_nodes
        src = jax.random.randint(ks[1], (num_edges,), 0, num_nodes)
        dst = jax.random.randint(ks[2], (num_edges,), 0, dst_hi)
        edge_index = jnp.stack([src, dst]).astype(jnp.int32)            # [2, E]
        edge_weight = jax.random.uniform(ks[3], (num_edges,), jnp.float32, 0.1, 1.0)

        # conv1: TAGConv(F_in -> 4), K=3 -> (K+1) weight mats + bias
        W1 = 0.5 * jax.random.normal(ks[4], (K_HOPS + 1, num_node_features, hidden), jnp.float32)
        b1 = 0.1 * jax.random.normal(ks[5], (1, hidden), jnp.float32)
        # conv2: TAGConv(4 -> num_classes), K=3
        W2 = 0.5 * jax.random.normal(ks[6], (K_HOPS + 1, hidden, num_classes), jnp.float32)
        b2 = 0.1 * jax.random.normal(ks[7], (1, num_classes), jnp.float32)
        # endLinear: Linear(num_classes -> num_classes)
        Wl = 0.5 * jax.random.normal(ks[8], (num_classes, num_classes), jnp.float32)
        bl = 0.1 * jax.random.normal(ks[9], (1, num_classes), jnp.float32)

        out = jax.block_until_ready(
            tagnet_forward(x, edge_index, edge_weight, W1, b1, W2, b2, Wl, bl))
        ref = tagnet_reference(x, edge_index, edge_weight, W1, b1, W2, b2, Wl, bl)
        assert out.shape == (num_nodes, num_classes)
        # bf16 A / bf16 hop operands in the kernel vs a pure-f32 reference.
        err = float(jnp.max(jnp.abs(out - ref)))
        assert jnp.allclose(out, ref, atol=1e-2, rtol=1e-2), f"max abs err {err}"

    key = jax.random.PRNGKey(0)
    k1, k2, k3 = jax.random.split(key, 3)
    run_case(num_nodes=10, num_edges=20, key=k1)        # spec-sized graph, 1x1 block
    run_case(num_nodes=600, num_edges=4000, key=k2)     # 768-pad, single-tile A, fused 3-hop grid
    run_case(num_nodes=2300, num_edges=6000, key=k3,    # 2304-pad, 9x3 block grid with
             localized_to=1000)                         # empty A block-rows (sparse skip path)
    print("KERNEL_OK")
</pallas_src>

<mosaic_0001>
module attributes {stable_mosaic.version = 11 : i64} {
  func.func @_tag_prop_kernel(%arg0: i32, %arg1: i32, %arg2: i32, %arg3: memref<1xi32, #tpu.memory_space<smem>>, %arg4: memref<1xi32, #tpu.memory_space<smem>>, %arg5: memref<2xf32, #tpu.memory_space<smem>>, %arg6: memref<256x256xbf16, #tpu.memory_space<vmem>>, %arg7: memref<256x4xbf16, #tpu.memory_space<vmem>>, %arg8: memref<1x256x4xf32, #tpu.memory_space<vmem>>, %arg9: memref<1x256x4xf32, #tpu.memory_space<vmem>>, %arg10: memref<256x4xf32, #tpu.memory_space<vmem>>, %arg11: memref<512x4xbf16, #tpu.memory_space<vmem>>) attributes {dimension_semantics = [#tpu.dimension_semantics<arbitrary>, #tpu.dimension_semantics<arbitrary>, #tpu.dimension_semantics<arbitrary>], iteration_bounds = array<i64: 3, 1, 1>, scalar_prefetch = 2 : i64, scratch_operands = 2 : i64, tpu.core_type = #tpu.core_type<tc>, window_params = [{transform_indices = @transform_0, window_bounds = array<i64: 2>}, {transform_indices = @transform_1, window_bounds = array<i64: 256, 256>}, {pipeline_mode = #tpu.pipeline_mode<synchronous>, transform_indices = @transform_2, window_bounds = array<i64: 256, 4>}, {transform_indices = @transform_3, window_bounds = array<i64: 1, 256, 4>}, {transform_indices = @transform_4, window_bounds = array<i64: 1, 256, 4>}]} {
    %c2_i32 = arith.constant 2 : i32
    %c0_i32 = arith.constant 0 : i32
    %0 = arith.cmpi eq, %c2_i32, %c0_i32 : i32
    %c1_i32 = arith.constant 1 : i32
    %1 = arith.select %0, %c1_i32, %c2_i32 : i32
    %2 = arith.remsi %arg0, %1 : i32
    %c0_i32_0 = arith.constant 0 : i32
    %3 = arith.cmpi ne, %2, %c0_i32_0 : i32
    %c0_i32_1 = arith.constant 0 : i32
    %4 = arith.cmpi slt, %2, %c0_i32_1 : i32
    %c0_i32_2 = arith.constant 0 : i32
    %5 = arith.cmpi slt, %1, %c0_i32_2 : i32
    %6 = arith.xori %4, %5 : i1
    %7 = arith.andi %6, %3 : i1
    %8 = arith.addi %2, %1 : i32
    %9 = arith.select %7, %8, %2 : i32
    %c0_i32_3 = arith.constant 0 : i32
    %10 = arith.cmpi eq, %arg0, %c0_i32_3 : i32
    %c0_i32_4 = arith.constant 0 : i32
    %11 = arith.cmpi eq, %arg1, %c0_i32_4 : i32
    %12 = arith.andi %10, %11 : i1
    %c0_i32_5 = arith.constant 0 : i32
    %13 = arith.cmpi eq, %arg2, %c0_i32_5 : i32
    %14 = arith.andi %12, %13 : i1
    %15 = arith.extui %14 : i1 to i32
    %c0_i32_6 = arith.constant 0 : i32
    %16 = arith.cmpi ne, %15, %c0_i32_6 : i32
    scf.if %16 {
      %c0 = arith.constant 0 : index
      %c0_15 = arith.constant 0 : index
      %33 = vector.load %arg7[%c0, %c0_15] : memref<256x4xbf16, #tpu.memory_space<vmem>>, vector<256x4xbf16>
      %c0_16 = arith.constant 0 : index
      %c0_17 = arith.constant 0 : index
      %34 = vector.load %arg11[%c0_16, %c0_17] : memref<512x4xbf16, #tpu.memory_space<vmem>>, vector<256x4xbf16>
      tpu.vector_store %arg11[%c0_16, %c0_17], %33 {strides = array<i32>} : memref<512x4xbf16, #tpu.memory_space<vmem>>, vector<256x4xbf16>,
    } else {
    }
    %c0_i32_7 = arith.constant 0 : i32
    %17 = arith.cmpi eq, %arg2, %c0_i32_7 : i32
    %18 = arith.extui %17 : i1 to i32
    %c0_i32_8 = arith.constant 0 : i32
    %19 = arith.cmpi ne, %18, %c0_i32_8 : i32
    scf.if %19 {
      %c0 = arith.constant 0 : index
      %c0_15 = arith.constant 0 : index
      %c0_16 = arith.constant 0 : index
      %33 = vector.load %arg8[%c0, %c0_15, %c0_16] : memref<1x256x4xf32, #tpu.memory_space<vmem>>, vector<1x256x4xf32>
      %34 = vector.shape_cast %33 : vector<1x256x4xf32> to vector<256x4xf32>
      %c0_17 = arith.constant 0 : index
      %c0_18 = arith.constant 0 : index
      %35 = vector.load %arg10[%c0_17, %c0_18] : memref<256x4xf32, #tpu.memory_space<vmem>>, vector<256x4xf32>
      tpu.vector_store %arg10[%c0_17, %c0_18], %34 {strides = array<i32>} : memref<256x4xf32, #tpu.memory_space<vmem>>, vector<256x4xf32>,
    } else {
    }
    %20 = arith.index_cast %arg1 : i32 to index
    %21 = memref.load %arg3[%20] : memref<1xi32, #tpu.memory_space<smem>>
    %22 = arith.cmpi slt, %arg2, %21 : i32
    %23 = arith.extui %22 : i1 to i32
    %c0_i32_9 = arith.constant 0 : i32
    %24 = arith.cmpi ne, %23, %c0_i32_9 : i32
    scf.if %24 {
      %c1_i32_15 = arith.constant 1 : i32
      %33 = arith.muli %arg1, %c1_i32_15 : i32
      %34 = arith.addi %33, %arg2 : i32
      %35 = arith.index_cast %34 : i32 to index
      %36 = memref.load %arg4[%35] : memref<1xi32, #tpu.memory_space<smem>>
      %c256_i32 = arith.constant 256 : i32
      %37 = arith.muli %9, %c256_i32 : i32
      %c256_i32_16 = arith.constant 256 : i32
      %38 = arith.muli %36, %c256_i32_16 : i32
      %39 = arith.addi %37, %38 : i32
      %40 = tpu.assume_multiple %39, 256 : i32
      %c0 = arith.constant 0 : index
      %c0_17 = arith.constant 0 : index
      %41 = vector.load %arg10[%c0, %c0_17] : memref<256x4xf32, #tpu.memory_space<vmem>>, vector<256x4xf32>
      %c0_18 = arith.constant 0 : index
      %c0_19 = arith.constant 0 : index
      %42 = vector.load %arg6[%c0_18, %c0_19] : memref<256x256xbf16, #tpu.memory_space<vmem>>, vector<256x256xbf16>
      %43 = arith.index_cast %40 : i32 to index
      %c0_20 = arith.constant 0 : index
      %44 = vector.load %arg11[%43, %c0_20] : memref<512x4xbf16, #tpu.memory_space<vmem>>, vector<256x4xbf16>
      %cst = arith.constant dense<0.000000e+00> : vector<256x4xf32>
      %45 = tpu.matmul %42, %44, %cst {dimension_numbers = #tpu.dot_dimension_numbers<[1], [0], [0], [1], [0, 0, 1, 1], [], []>} : vector<256x256xbf16>, vector<256x4xbf16>, vector<256x4xf32> -> vector<256x4xf32>
      %46 = arith.addf %41, %45 : vector<256x4xf32>
      %c0_21 = arith.constant 0 : index
      %c0_22 = arith.constant 0 : index
      %47 = vector.load %arg10[%c0_21, %c0_22] : memref<256x4xf32, #tpu.memory_space<vmem>>, vector<256x4xf32>
      tpu.vector_store %arg10[%c0_21, %c0_22], %46 {strides = array<i32>} : memref<256x4xf32, #tpu.memory_space<vmem>>, vector<256x4xf32>,
    } else {
    }
    %c0_i32_10 = arith.constant 0 : i32
    %25 = arith.cmpi eq, %arg2, %c0_i32_10 : i32
    %c2_i32_11 = arith.constant 2 : i32
    %26 = arith.cmpi slt, %arg0, %c2_i32_11 : i32
    %27 = arith.andi %25, %26 : i1
    %28 = arith.extui %27 : i1 to i32
    %c0_i32_12 = arith.constant 0 : i32
    %29 = arith.cmpi ne, %28, %c0_i32_12 : i32
    scf.if %29 {
      %c1_i32_15 = arith.constant 1 : i32
      %33 = arith.subi %c1_i32_15, %9 : i32
      %c256_i32 = arith.constant 256 : i32
      %34 = arith.muli %33, %c256_i32 : i32
      %c256_i32_16 = arith.constant 256 : i32
      %35 = arith.muli %arg1, %c256_i32_16 : i32
      %36 = arith.addi %34, %35 : i32
      %37 = tpu.assume_multiple %36, 256 : i32
      %c0 = arith.constant 0 : index
      %c0_17 = arith.constant 0 : index
      %38 = vector.load %arg10[%c0, %c0_17] : memref<256x4xf32, #tpu.memory_space<vmem>>, vector<256x4xf32>
      %39 = arith.truncf %38 : vector<256x4xf32> to vector<256x4xbf16>
      %40 = arith.index_cast %37 : i32 to index
      %c0_18 = arith.constant 0 : index
      %41 = vector.load %arg11[%40, %c0_18] : memref<512x4xbf16, #tpu.memory_space<vmem>>, vector<256x4xbf16>
      tpu.vector_store %arg11[%40, %c0_18], %39 {strides = array<i32>} : memref<512x4xbf16, #tpu.memory_space<vmem>>, vector<256x4xbf16>,
    } else {
    }
    %c0_i32_13 = arith.constant 0 : i32
    %30 = arith.cmpi eq, %arg2, %c0_i32_13 : i32
    %31 = arith.extui %30 : i1 to i32
    %c0_i32_14 = arith.constant 0 : i32
    %32 = arith.cmpi ne, %31, %c0_i32_14 : i32
    scf.if %32 {
      %c0 = arith.constant 0 : index
      %c0_15 = arith.constant 0 : index
      %33 = vector.load %arg10[%c0, %c0_15] : memref<256x4xf32, #tpu.memory_space<vmem>>, vector<256x4xf32>
      %cst = arith.constant 0.000000e+00 : f32
      %34 = vector.broadcast %cst : f32 to vector<256x4xf32>
      %35 = arith.maximumf %33, %34 : vector<256x4xf32>
      %c0_16 = arith.constant 0 : index
      %c0_17 = arith.constant 0 : index
      %c0_18 = arith.constant 0 : index
      %36 = vector.load %arg9[%c0_16, %c0_17, %c0_18] : memref<1x256x4xf32, #tpu.memory_space<vmem>>, vector<1x256x4xf32>
      %37 = vector.shape_cast %36 : vector<1x256x4xf32> to vector<256x4xf32>
      %38 = vector.shape_cast %35 : vector<256x4xf32> to vector<1x256x4xf32>
      tpu.vector_store %arg9[%c0_16, %c0_17, %c0_18], %38 {strides = array<i32>} : memref<1x256x4xf32, #tpu.memory_space<vmem>>, vector<1x256x4xf32>,
    } else {
    }
    return
  }
  func.func @transform_0(%arg0: i32, %arg1: i32, %arg2: i32, %arg3: memref<1xi32, #tpu.memory_space<smem>>, %arg4: memref<1xi32, #tpu.memory_space<smem>>) -> i32 {
    %c0_i32 = arith.constant 0 : i32
    %c0_i32_0 = arith.constant 0 : i32
    return %c0_i32 : i32
  }
  func.func @transform_1(%arg0: i32, %arg1: i32, %arg2: i32, %arg3: memref<1xi32, #tpu.memory_space<smem>>, %arg4: memref<1xi32, #tpu.memory_space<smem>>) -> (i32, i32) {
    %c1_i32 = arith.constant 1 : i32
    %0 = arith.muli %arg1, %c1_i32 : i32
    %1 = arith.addi %0, %arg2 : i32
    %2 = arith.index_cast %1 : i32 to index
    %3 = memref.load %arg4[%2] : memref<1xi32, #tpu.memory_space<smem>>
    %c0_i32 = arith.constant 0 : i32
    return %arg1, %3 : i32, i32
  }
  func.func @transform_2(%arg0: i32, %arg1: i32, %arg2: i32, %arg3: memref<1xi32, #tpu.memory_space<smem>>, %arg4: memref<1xi32, #tpu.memory_space<smem>>) -> (i32, i32) {
    %c0_i32 = arith.constant 0 : i32
    %c0_i32_0 = arith.constant 0 : i32
    %c0_i32_1 = arith.constant 0 : i32
    return %c0_i32, %c0_i32_0 : i32, i32
  }
  func.func @transform_3(%arg0: i32, %arg1: i32, %arg2: i32, %arg3: memref<1xi32, #tpu.memory_space<smem>>, %arg4: memref<1xi32, #tpu.memory_space<smem>>) -> (i32, i32, i32) {
    %c0_i32 = arith.constant 0 : i32
    %c0_i32_0 = arith.constant 0 : i32
    return %arg0, %arg1, %c0_i32 : i32, i32, i32
  }
  func.func @transform_4(%arg0: i32, %arg1: i32, %arg2: i32, %arg3: memref<1xi32, #tpu.memory_space<smem>>, %arg4: memref<1xi32, #tpu.memory_space<smem>>) -> (i32, i32, i32) {
    %c0_i32 = arith.constant 0 : i32
    %c0_i32_0 = arith.constant 0 : i32
    return %arg0, %arg1, %c0_i32 : i32, i32, i32
  }
}

</mosaic_0001>

<llo_original>
// kernel: tpu_custom_call.1
$region0: #{tpu_custom_call.1}
  #allocation0 [shape = 'u32[]', space=smem, size = 0x4, offset = 0x4, fixed_abs, tag = 'smem constant byte address 0x4 - core index']
  #allocation1 [shape = 'u32[72,128]{1,0:T(1,128)}', space=vmem, size = 0x9000, scoped, tag = 'internal scratch']
  #allocation2 [shape = 'f32[256,4]{1,0:T(8,128)}', space=vmem, size = 0x20000, scoped, tag = 'scratch operand']
  #allocation3 [shape = 'bf16[512,4]{1,0:T(8,128)(2,1)}', space=vmem, size = 0x20000, scoped, tag = 'scratch operand']
  #allocation4 [shape = 's32[1]{0}', space=sflag, size = 0x4, scoped, tag = 'scoped memory for tpu_custom_call.1']
  #allocation5 [shape = 's32[1]{0:T(128)S(6)}', space=smem, size = 0x200, scoped, tag = 'prefetched SMEM operand 0']
  #allocation6 [shape = 's32[1]{0:T(128)S(6)}', space=smem, size = 0x200, scoped, tag = 'prefetched SMEM operand 1']
  %s0 = inlined_call_operand.<no memory space> [shape: s32[1], index: 0, kind: input, shape index: {}]
  %s1 = inlined_call_operand.<no memory space> [shape: s32[1], index: 1, kind: input, shape index: {}]
  %s2 = inlined_call_operand.vmem [shape: f32[2], index: 2, kind: input, shape index: {}]
  %s3 = inlined_call_operand.vmem [shape: bf16[256,256], index: 3, kind: input, shape index: {}]
  %s4 = inlined_call_operand.vmem [shape: bf16[256,4], index: 4, kind: input, shape index: {}]
  %s5 = inlined_call_operand.vmem [shape: f32[3,256,4], index: 5, kind: input, shape index: {}]
  %s6 = inlined_call_operand.vmem [shape: f32[3,256,4], index: 6, kind: output, shape index: {}]
  %s7 = sld [smem:[#allocation0]]
  $region73: #{tpu_custom_call.1} parent=0
    _
  %s9 = ssub.s32 1, %s7
  %s10 = scalar_select 0, %s9, %s7
  %11 = sst [smem:[#allocation5]] %s0
  %12 = sst [smem:[#allocation6]] %s1
  $region1: #{tpu_custom_call.1} parent=0
    #allocation7 [shape = 'u8[512]{0}', space=smem, size = 0x200, scoped, tag = 'input window, operand 2, single buffered']
    #allocation8 [shape = 's32[2]{0}', space=sflag, size = 0x8, scoped, tag = 'scoped memory for tpu_custom_call.1']
    %13 = vsyncpa [#allocation8], 0
    loop: start=0, step=1, limit=5
    $region2: #{tpu_custom_call.1} parent=1 // loop_pre_header
      _
    $region3: #{tpu_custom_call.1} parent=1 // loop_header
      %s15 = sphi 0, %s19
      %p16 = scmp.ge.s32.totalorder %s15, 5
      %s22 = sphi 0, %s41
      %s23 = sphi 0, %s37
      %s24 = sphi 0, %s33
      %s25 = sphi 0, %s22
      %s26 = sphi 0, %s23
      %s27 = sphi 0, %s24
      %s28 = sphi 0, %s25
      %s29 = sphi 0, %s26
      %s30 = sphi 0, %s27
      %s42 = sphi 0, %s42
      %s44 = sphi 0, %s42
      %s45 = sphi 0, %s44
      %s59 = sphi 0, %s45
      %s71 = sphi 0, %s73
      %s74 = sphi 0, %s71
      %s75 = sphi 0, %s74
      %s91 = sphi 0, %s75
      %s95 = sphi 0, %s95
      %s97 = sphi 0, %s95
      %s98 = sphi 0, %s97
      %s112 = sphi 0, %s98
      %s120 = sphi 0, %s122
      %s123 = sphi 0, %s120
      %s124 = sphi 0, %s123
      %s140 = sphi 0, %s124
      %s148 = sphi 0, %s150
      %s151 = sphi 0, %s148
      %s152 = sphi 0, %s151
      %s168 = sphi 0, %s152
    $region4: #{tpu_custom_call.1} parent=1 // loop_header_branch
      %18 = sbr.rel (%p16) target = $region8
    $region5: #{tpu_custom_call.1} parent=1 // loop_body
      %s20 = ssub.s32 %s15, 1
      %s21 = ssub.s32 %s15, 2
      %s31 = sadd.s32 1, %s24
      %p32 = scmp.ge.s32.totalorder %s31, 1
      %s33 = scalar_select %p32, 0, %s31
      %s34 = sadd.s32 1, %s23
      %s35 = scalar_select %p32, %s34, %s23
      %p36 = scmp.ge.s32.totalorder %s35, 1
      %s37 = scalar_select %p36, 0, %s35
      %s38 = sadd.s32 1, %s22
      %s39 = scalar_select %p36, %s38, %s22
      %p40 = scmp.ge.s32.totalorder %s39, 3
      %s41 = scalar_select %p40, 0, %s39
      %s43 = sadd.s32 %s42, 1
      %p46 = scmp.eq.s32.totalorder %s15, 2
      %p47 = scmp.ne.s32.totalorder %s42, %s44
      %p48 = scmp.eq.s32.totalorder %s15, 0
      %p49 = por %p47, %p48
      %p50 = scmp.ne.s32.totalorder %s42, %s44
      %p51 = scmp.eq.s32.totalorder %s20, 2
      %p52 = por %p50, %p51
      %p53 = scmp.ne.s32.totalorder %s44, %s45
      %p54 = scmp.eq.s32.totalorder %s20, 0
      %p55 = por %p53, %p54
      %p56 = scmp.ne.s32.totalorder %s44, %s45
      %p57 = scmp.eq.s32.totalorder %s21, 2
      %p58 = por %p56, %p57
      %p60 = scmp.ne.s32.totalorder %s45, %s59
      %p61 = scmp.eq.s32.totalorder %s21, 0
      %p62 = por %p60, %p61
      %s63 = sadd.s32 %s23, %s24
      %s64 = sld [smem:[#allocation6 + %s63]]
      %s65 = sadd.s32 %s37, %s33
      %s66 = sld [smem:[#allocation6 + %s65]]
      %s67 = ssub.s32 %s23, %s37
      %s68 = ssub.s32 %s64, %s66
      %s69 = sor.u32 %s67, %s68
      %p70 = scmp.eq.s32.totalorder %s69, 0
      %s72 = sadd.s32 %s71, 1
      %s73 = scalar_select %p70, %s71, %s72
      %p76 = pneg %p70
      %p77 = scmp.eq.s32.totalorder %s15, 2
      %p78 = por %p76, %p77
      %p79 = scmp.ne.s32.totalorder %s71, %s74
      %p80 = scmp.eq.s32.totalorder %s15, 0
      %p81 = por %p79, %p80
      %p82 = scmp.ne.s32.totalorder %s71, %s74
      %p83 = scmp.eq.s32.totalorder %s20, 2
      %p84 = por %p82, %p83
      %p85 = scmp.ne.s32.totalorder %s74, %s75
      %p86 = scmp.eq.s32.totalorder %s20, 0
      %p87 = por %p85, %p86
      %p88 = scmp.ne.s32.totalorder %s74, %s75
      %p89 = scmp.eq.s32.totalorder %s21, 2
      %p90 = por %p88, %p89
      %p92 = scmp.ne.s32.totalorder %s75, %s91
      %p93 = scmp.eq.s32.totalorder %s21, 0
      %p94 = por %p92, %p93
      %s96 = sadd.s32 %s95, 1
      %p99 = scmp.eq.s32.totalorder %s15, 2
      %p100 = scmp.ne.s32.totalorder %s95, %s97
      %p101 = scmp.eq.s32.totalorder %s15, 0
      %p102 = por %p100, %p101
      %p103 = scmp.ne.s32.totalorder %s95, %s97
      %p104 = scmp.eq.s32.totalorder %s20, 2
      %p105 = por %p103, %p104
      %p106 = scmp.ne.s32.totalorder %s97, %s98
      %p107 = scmp.eq.s32.totalorder %s20, 0
      %p108 = por %p106, %p107
      %p109 = scmp.ne.s32.totalorder %s97, %s98
      %p110 = scmp.eq.s32.totalorder %s21, 2
      %p111 = por %p109, %p110
      %p113 = scmp.ne.s32.totalorder %s98, %s112
      %p114 = scmp.eq.s32.totalorder %s21, 0
      %p115 = por %p113, %p114
      %s116 = ssub.s32 %s22, %s41
      %s117 = ssub.s32 %s23, %s37
      %s118 = sor.u32 %s116, %s117
      %p119 = scmp.eq.s32.totalorder %s118, 0
      %s121 = sadd.s32 %s120, 1
      %s122 = scalar_select %p119, %s120, %s121
      %p125 = pneg %p119
      %p126 = scmp.eq.s32.totalorder %s15, 2
      %p127 = por %p125, %p126
      %p128 = scmp.ne.s32.totalorder %s120, %s123
      %p129 = scmp.eq.s32.totalorder %s15, 0
      %p130 = por %p128, %p129
      %p131 = scmp.ne.s32.totalorder %s120, %s123
      %p132 = scmp.eq.s32.totalorder %s20, 2
      %p133 = por %p131, %p132
      %p134 = scmp.ne.s32.totalorder %s123, %s124
      %p135 = scmp.eq.s32.totalorder %s20, 0
      %p136 = por %p134, %p135
      %p137 = scmp.ne.s32.totalorder %s123, %s124
      %p138 = scmp.eq.s32.totalorder %s21, 2
      %p139 = por %p137, %p138
      %p141 = scmp.ne.s32.totalorder %s124, %s140
      %p142 = scmp.eq.s32.totalorder %s21, 0
      %p143 = por %p141, %p142
      %s144 = ssub.s32 %s22, %s41
      %s145 = ssub.s32 %s23, %s37
      %s146 = sor.u32 %s144, %s145
      %p147 = scmp.eq.s32.totalorder %s146, 0
      %s149 = sadd.s32 %s148, 1
      %s150 = scalar_select %p147, %s148, %s149
      %p153 = pneg %p147
      %p154 = scmp.eq.s32.totalorder %s15, 2
      %p155 = por %p153, %p154
      %p156 = scmp.ne.s32.totalorder %s148, %s151
      %p157 = scmp.eq.s32.totalorder %s15, 0
      %p158 = por %p156, %p157
      %p159 = scmp.ne.s32.totalorder %s148, %s151
      %p160 = scmp.eq.s32.totalorder %s20, 2
      %p161 = por %p159, %p160
      %p162 = scmp.ne.s32.totalorder %s151, %s152
      %p163 = scmp.eq.s32.totalorder %s20, 0
      %p164 = por %p162, %p163
      %p165 = scmp.ne.s32.totalorder %s151, %s152
      %p166 = scmp.eq.s32.totalorder %s21, 2
      %p167 = por %p165, %p166
      %p169 = scmp.ne.s32.totalorder %s152, %s168
      %p170 = scmp.eq.s32.totalorder %s21, 0
      %p171 = por %p169, %p170
      %p172 = scmp.le.s32.totalorder 1, %s15
      %p173 = scmp.lt.s32.totalorder %s15, 4
      %p174 = pnand %p172, %p173
      %p175 = pneg %p174
      // Predicated region
      $region9: #{tpu_custom_call.1} parent=5 // pred_check
        _
      $region10: #{tpu_custom_call.1} parent=5 // pred_check_branch
        %177 = sbr.rel (%p174) target = $region12
      $region11: #{tpu_custom_call.1} parent=5 // pred_region
        %s178 = ssub.s32 %s15, 1
        // Predicated region
        $region13: #{tpu_custom_call.1} parent=11 // pred_check
          %p179 = pneg %p55
        $region14: #{tpu_custom_call.1} parent=11 // pred_check_branch
          %181 = sbr.rel (%p179) target = $region16
        $region15: #{tpu_custom_call.1} parent=11 // pred_region
          %183 = vsyncadd [#allocation8], 0
          %s185 = sshll.u32 %s2, 4
          %s186 = int_to_ptr.vmem [resolvable:$true] %s185
          %188 = dma.vmem_to_smem %s186, 16, [#allocation7], [#allocation8]
        $region16: #{tpu_custom_call.1} parent=11 // pred_fallthru
          _
        // Predicated region
        $region17: #{tpu_custom_call.1} parent=11 // pred_check
          %p189 = pneg %p87
        $region18: #{tpu_custom_call.1} parent=11 // pred_check_branch
          %191 = sbr.rel (%p189) target = $region20
        $region19: #{tpu_custom_call.1} parent=11 // pred_region
          %s192 = sadd.s32 %s26, %s27
          %s193 = sld [smem:[#allocation6 + %s192]]
          %s194 = smul.u32 32, %s26
          %s195 = smul.u32 2, %s193
          %p196 = scmp.lt.s32.totalorder %s194, 31
          %s197 = scalar_select %p196, %s194, 31
          %p198 = scmp.lt.s32.totalorder %s195, 1
          %s199 = scalar_select %p198, %s195, 1
          %s200 = smul.addr %s197, 2
          %s201 = sadd.s32 %s199, %s200
          %s202 = smul.addr %s201, 4
          %s203 = scalar_lea.vmem %s3, %s202
          %s204 = sadd.s32 %s26, %s27
          %s205 = sld [smem:[#allocation6 + %s204]]
          %s206 = smul.u32 32, %s26
          %s207 = smul.u32 2, %s205
        $region20: #{tpu_custom_call.1} parent=11 // pred_fallthru
          _
        // Predicated region
        $region21: #{tpu_custom_call.1} parent=11 // pred_check
          %p208 = pneg %p108
        $region22: #{tpu_custom_call.1} parent=11 // pred_check_branch
          %210 = sbr.rel (%p208) target = $region24
        $region23: #{tpu_custom_call.1} parent=11 // pred_region
          _
        $region24: #{tpu_custom_call.1} parent=11 // pred_fallthru
          _
      $region12: #{tpu_custom_call.1} parent=5 // pred_fallthru
        _
      %p211 = scmp.lt.s32.totalorder %s15, 3
      // Predicated region
      $region25: #{tpu_custom_call.1} parent=5 // pred_check
        %p212 = pneg %p211
      $region26: #{tpu_custom_call.1} parent=5 // pred_check_branch
        %214 = sbr.rel (%p212) target = $region28
      $region27: #{tpu_custom_call.1} parent=5 // pred_region
        // Predicated region
        $region29: #{tpu_custom_call.1} parent=27 // pred_check
          %p215 = pneg %p130
        $region30: #{tpu_custom_call.1} parent=27 // pred_check_branch
          %217 = sbr.rel (%p215) target = $region32
        $region31: #{tpu_custom_call.1} parent=27 // pred_region
          %s218 = smul.u32 32, %s23
          %p219 = scmp.lt.s32.totalorder %s22, 2
          %s220 = scalar_select %p219, %s22, 2
          %p221 = scmp.lt.s32.totalorder %s218, 31
          %s222 = scalar_select %p221, %s218, 31
          %s223 = smul.addr %s220, 32
          %s224 = sadd.s32 %s222, %s223
          %s225 = smul.addr %s224, 8
          %s226 = scalar_lea.vmem %s5, %s225
          %s227 = smul.u32 32, %s23
        $region32: #{tpu_custom_call.1} parent=27 // pred_fallthru
          _
      $region28: #{tpu_custom_call.1} parent=5 // pred_fallthru
        _
      %p228 = scmp.le.s32.totalorder 1, %s15
      %p229 = scmp.lt.s32.totalorder %s15, 4
      %p230 = pnand %p228, %p229
      %p231 = pneg %p230
      // Predicated region
      $region33: #{tpu_custom_call.1} parent=5 // pred_check
        _
      $region34: #{tpu_custom_call.1} parent=5 // pred_check_branch
        %233 = sbr.rel (%p230) target = $region36
      $region35: #{tpu_custom_call.1} parent=5 // pred_region
        %s234 = ssub.s32 %s15, 1
        // Predicated region
        $region37: #{tpu_custom_call.1} parent=35 // pred_check
          %p235 = pneg %p55
        $region38: #{tpu_custom_call.1} parent=35 // pred_check_branch
          %237 = sbr.rel (%p235) target = $region40
        $region39: #{tpu_custom_call.1} parent=35 // pred_region
          %239 = dma.done [#allocation8], 16
        $region40: #{tpu_custom_call.1} parent=35 // pred_fallthru
          _
        %240 = sfence
        %p241 = pneg %p55
        %p242 = pneg %p52
        %s243 = sadd.s32 %s26, %s27
        %s244 = sld [smem:[#allocation6 + %s243]]
        %s245 = smul.u32 32, %s26
        %s246 = smul.u32 2, %s244
        %p247 = scmp.lt.s32.totalorder %s245, 31
        %s248 = scalar_select %p247, %s245, 31
        %p249 = scmp.lt.s32.totalorder %s246, 1
        %s250 = scalar_select %p249, %s246, 1
        %s251 = smul.addr %s248, 2
        %s252 = sadd.s32 %s250, %s251
        %s253 = smul.addr %s252, 4
        %s254 = scalar_lea.vmem %s3, %s253
        %p255 = pneg %p87
        %p256 = pneg %p84
        %p257 = pneg %p108
        %p258 = pneg %p105
        %s259 = smul.u32 32, %s26
        %p260 = scmp.lt.s32.totalorder %s25, 2
        %s261 = scalar_select %p260, %s25, 2
        %p262 = scmp.lt.s32.totalorder %s259, 31
        %s263 = scalar_select %p262, %s259, 31
        %s264 = smul.addr %s261, 32
        %s265 = sadd.s32 %s263, %s264
        %s266 = smul.addr %s265, 8
        %s267 = scalar_lea.vmem %s5, %s266
        %p268 = pneg %p136
        %p269 = pneg %p133
        %p270 = pneg %p164
        %p271 = pneg %p161
        %s272 = smul.u32 32, %s26
        %p273 = scmp.lt.s32.totalorder %s25, 2
        %s274 = scalar_select %p273, %s25, 2
        %p275 = scmp.lt.s32.totalorder %s272, 31
        %s276 = scalar_select %p275, %s272, 31
        %s277 = smul.addr %s274, 32
        %s278 = sadd.s32 %s276, %s277
        %s279 = smul.addr %s278, 8
        %s280 = scalar_lea.vmem %s6, %s279
        %s281 = sadd.s32 %s26, %s27
        %s282 = sld [smem:[#allocation6 + %s281]]
        %s283 = smul.u32 32, %s26
        %s284 = smul.u32 2, %s282
        %p285 = scmp.lt.s32.totalorder %s283, 31
        %s286 = scalar_select %p285, %s283, 31
        %p287 = scmp.lt.s32.totalorder %s284, 1
        %s288 = scalar_select %p287, %s284, 1
        %s289 = smul.addr %s286, 2
        %s290 = sadd.s32 %s288, %s289
        %s291 = smul.addr %s290, 4
        %s292 = scalar_lea.vmem %s3, %s291
        %s293 = sadd.s32 %s26, %s27
        %s294 = sld [smem:[#allocation6 + %s293]]
        %s295 = smul.u32 32, %s26
        %s296 = smul.u32 2, %s294
        %s297 = smul.u32 32, %s26
        %p298 = scmp.lt.s32.totalorder %s25, 2
        %s299 = scalar_select %p298, %s25, 2
        %p300 = scmp.lt.s32.totalorder %s297, 31
        %s301 = scalar_select %p300, %s297, 31
        %s302 = smul.addr %s299, 32
        %s303 = sadd.s32 %s301, %s302
        %s304 = smul.addr %s303, 8
        %s305 = scalar_lea.vmem %s5, %s304
        %s306 = smul.u32 32, %s26
        %s307 = smul.u32 32, %s26
        %p308 = scmp.lt.s32.totalorder %s25, 2
        %s309 = scalar_select %p308, %s25, 2
        %p310 = scmp.lt.s32.totalorder %s307, 31
        %s311 = scalar_select %p310, %s307, 31
        %s312 = smul.addr %s309, 32
        %s313 = sadd.s32 %s311, %s312
        %s314 = smul.addr %s313, 8
        %s315 = scalar_lea.vmem %s6, %s314
        %s316 = smul.u32 32, %s26
        %p317 = scmp.lt.s32.totalorder %s25, 0
        %s318 = ssub.s32 0, %s25
        %s319 = scalar_select %p317, %s318, %s25
        %s320 = sand.u32 %s319, 1
        %s321 = ssub.s32 0, %s320
        %s322 = scalar_select %p317, %s321, %s320
        %p323 = scmp.ne.s32.totalorder %s322, 0
        %p324 = scmp.lt.s32.totalorder %s322, 0
        %p325 = pnand %p324, %p323
        %p326 = pneg %p325
        %s327 = sadd.s32 %s322, 2
        %s328 = scalar_select %p326, %s327, %s322
        %p329 = scmp.eq.s32.totalorder %s25, 0
        %p330 = scmp.eq.s32.totalorder %s26, 0
        %p331 = pnand %p329, %p330
        %p332 = pneg %p331
        %p333 = scmp.eq.s32.totalorder %s27, 0
        %p334 = pnand %p332, %p333
        %p335 = pneg %p334
        // Predicated region
        $region41: #{tpu_custom_call.1} parent=35 // pred_check
          _
        $region42: #{tpu_custom_call.1} parent=35 // pred_check_branch
          %337 = sbr.rel (%p334) target = $region44
        $region43: #{tpu_custom_call.1} parent=35 // pred_region
          %v338 = vld [vmem:[%s4] sm:$0xf]
          %v339 = vld [vmem:[%s4 + $0x4] sm:$0xf]
          %v340 = vld [vmem:[%s4 + $0x8] sm:$0xf]
          %v341 = vld [vmem:[%s4 + $0xc] sm:$0xf]
          %v342 = vld [vmem:[%s4 + $0x10] sm:$0xf]
          %v343 = vld [vmem:[%s4 + $0x14] sm:$0xf]
          %v344 = vld [vmem:[%s4 + $0x18] sm:$0xf]
          %v345 = vld [vmem:[%s4 + $0x1c] sm:$0xf]
          %v346 = vld [vmem:[%s4 + $0x20] sm:$0xf]
          %v347 = vld [vmem:[%s4 + $0x24] sm:$0xf]
          %v348 = vld [vmem:[%s4 + $0x28] sm:$0xf]
          %v349 = vld [vmem:[%s4 + $0x2c] sm:$0xf]
          %v350 = vld [vmem:[%s4 + $0x30] sm:$0xf]
          %v351 = vld [vmem:[%s4 + $0x34] sm:$0xf]
          %v352 = vld [vmem:[%s4 + $0x38] sm:$0xf]
          %v353 = vld [vmem:[%s4 + $0x3c] sm:$0xf]
          %v354 = vld [vmem:[%s4 + $0x40] sm:$0xf]
          %v355 = vld [vmem:[%s4 + $0x44] sm:$0xf]
          %v356 = vld [vmem:[%s4 + $0x48] sm:$0xf]
          %v357 = vld [vmem:[%s4 + $0x4c] sm:$0xf]
          %v358 = vld [vmem:[%s4 + $0x50] sm:$0xf]
          %v359 = vld [vmem:[%s4 + $0x54] sm:$0xf]
          %v360 = vld [vmem:[%s4 + $0x58] sm:$0xf]
          %v361 = vld [vmem:[%s4 + $0x5c] sm:$0xf]
          %v362 = vld [vmem:[%s4 + $0x60] sm:$0xf]
          %v363 = vld [vmem:[%s4 + $0x64] sm:$0xf]
          %v364 = vld [vmem:[%s4 + $0x68] sm:$0xf]
          %v365 = vld [vmem:[%s4 + $0x6c] sm:$0xf]
          %v366 = vld [vmem:[%s4 + $0x70] sm:$0xf]
          %v367 = vld [vmem:[%s4 + $0x74] sm:$0xf]
          %v368 = vld [vmem:[%s4 + $0x78] sm:$0xf]
          %v369 = vld [vmem:[%s4 + $0x7c] sm:$0xf]
          %vm370 = vcmask 27648
          %371 = vst.msk [vmem:[#allocation3] sm:$0xf] %vm370, %v338
          %372 = vst.msk [vmem:[#allocation3 + $0x4] sm:$0xf] %vm370, %v339
          %373 = vst.msk [vmem:[#allocation3 + $0x8] sm:$0xf] %vm370, %v340
          %374 = vst.msk [vmem:[#allocation3 + $0xc] sm:$0xf] %vm370, %v341
          %375 = vst.msk [vmem:[#allocation3 + $0x10] sm:$0xf] %vm370, %v342
          %376 = vst.msk [vmem:[#allocation3 + $0x14] sm:$0xf] %vm370, %v343
          %377 = vst.msk [vmem:[#allocation3 + $0x18] sm:$0xf] %vm370, %v344
          %378 = vst.msk [vmem:[#allocation3 + $0x1c] sm:$0xf] %vm370, %v345
          %379 = vst.msk [vmem:[#allocation3 + $0x20] sm:$0xf] %vm370, %v346
          %380 = vst.msk [vmem:[#allocation3 + $0x24] sm:$0xf] %vm370, %v347
          %381 = vst.msk [vmem:[#allocation3 + $0x28] sm:$0xf] %vm370, %v348
          %382 = vst.msk [vmem:[#allocation3 + $0x2c] sm:$0xf] %vm370, %v349
          %383 = vst.msk [vmem:[#allocation3 + $0x30] sm:$0xf] %vm370, %v350
          %384 = vst.msk [vmem:[#allocation3 + $0x34] sm:$0xf] %vm370, %v351
          %385 = vst.msk [vmem:[#allocation3 + $0x38] sm:$0xf] %vm370, %v352
          %386 = vst.msk [vmem:[#allocation3 + $0x3c] sm:$0xf] %vm370, %v353
          %387 = vst.msk [vmem:[#allocation3 + $0x40] sm:$0xf] %vm370, %v354
          %388 = vst.msk [vmem:[#allocation3 + $0x44] sm:$0xf] %vm370, %v355
          %389 = vst.msk [vmem:[#allocation3 + $0x48] sm:$0xf] %vm370, %v356
          %390 = vst.msk [vmem:[#allocation3 + $0x4c] sm:$0xf] %vm370, %v357
          %391 = vst.msk [vmem:[#allocation3 + $0x50] sm:$0xf] %vm370, %v358
          %392 = vst.msk [vmem:[#allocation3 + $0x54] sm:$0xf] %vm370, %v359
          %393 = vst.msk [vmem:[#allocation3 + $0x58] sm:$0xf] %vm370, %v360
          %394 = vst.msk [vmem:[#allocation3 + $0x5c] sm:$0xf] %vm370, %v361
          %395 = vst.msk [vmem:[#allocation3 + $0x60] sm:$0xf] %vm370, %v362
          %396 = vst.msk [vmem:[#allocation3 + $0x64] sm:$0xf] %vm370, %v363
          %397 = vst.msk [vmem:[#allocation3 + $0x68] sm:$0xf] %vm370, %v364
          %398 = vst.msk [vmem:[#allocation3 + $0x6c] sm:$0xf] %vm370, %v365
          %399 = vst.msk [vmem:[#allocation3 + $0x70] sm:$0xf] %vm370, %v366
          %400 = vst.msk [vmem:[#allocation3 + $0x74] sm:$0xf] %vm370, %v367
          %401 = vst.msk [vmem:[#allocation3 + $0x78] sm:$0xf] %vm370, %v368
          %402 = vst.msk [vmem:[#allocation3 + $0x7c] sm:$0xf] %vm370, %v369
        $region44: #{tpu_custom_call.1} parent=35 // pred_fallthru
          _
        // Predicated region
        $region45: #{tpu_custom_call.1} parent=35 // pred_check
          %p403 = pneg %p333
        $region46: #{tpu_custom_call.1} parent=35 // pred_check_branch
          %405 = sbr.rel (%p403) target = $region48
        $region47: #{tpu_custom_call.1} parent=35 // pred_region
          %v406 = vld [vmem:[%s305] sm:$0xff]
          %v407 = vld [vmem:[%s305 + $0x8] sm:$0xff]
          %v408 = vld [vmem:[%s305 + $0x10] sm:$0xff]
          %v409 = vld [vmem:[%s305 + $0x18] sm:$0xff]
          %v410 = vld [vmem:[%s305 + $0x20] sm:$0xff]
          %v411 = vld [vmem:[%s305 + $0x28] sm:$0xff]
          %v412 = vld [vmem:[%s305 + $0x30] sm:$0xff]
          %v413 = vld [vmem:[%s305 + $0x38] sm:$0xff]
          %v414 = vld [vmem:[%s305 + $0x40] sm:$0xff]
          %v415 = vld [vmem:[%s305 + $0x48] sm:$0xff]
          %v416 = vld [vmem:[%s305 + $0x50] sm:$0xff]
          %v417 = vld [vmem:[%s305 + $0x58] sm:$0xff]
          %v418 = vld [vmem:[%s305 + $0x60] sm:$0xff]
          %v419 = vld [vmem:[%s305 + $0x68] sm:$0xff]
          %v420 = vld [vmem:[%s305 + $0x70] sm:$0xff]
          %v421 = vld [vmem:[%s305 + $0x78] sm:$0xff]
          %v422 = vld [vmem:[%s305 + $0x80] sm:$0xff]
          %v423 = vld [vmem:[%s305 + $0x88] sm:$0xff]
          %v424 = vld [vmem:[%s305 + $0x90] sm:$0xff]
          %v425 = vld [vmem:[%s305 + $0x98] sm:$0xff]
          %v426 = vld [vmem:[%s305 + $0xa0] sm:$0xff]
          %v427 = vld [vmem:[%s305 + $0xa8] sm:$0xff]
          %v428 = vld [vmem:[%s305 + $0xb0] sm:$0xff]
          %v429 = vld [vmem:[%s305 + $0xb8] sm:$0xff]
          %v430 = vld [vmem:[%s305 + $0xc0] sm:$0xff]
          %v431 = vld [vmem:[%s305 + $0xc8] sm:$0xff]
          %v432 = vld [vmem:[%s305 + $0xd0] sm:$0xff]
          %v433 = vld [vmem:[%s305 + $0xd8] sm:$0xff]
          %v434 = vld [vmem:[%s305 + $0xe0] sm:$0xff]
          %v435 = vld [vmem:[%s305 + $0xe8] sm:$0xff]
          %v436 = vld [vmem:[%s305 + $0xf0] sm:$0xff]
          %v437 = vld [vmem:[%s305 + $0xf8] sm:$0xff]
          %vm438 = vcmask 31744
          %439 = vst.msk [vmem:[#allocation2] sm:$0xff] %vm438, %v406
          %440 = vst.msk [vmem:[#allocation2 + $0x8] sm:$0xff] %vm438, %v407
          %441 = vst.msk [vmem:[#allocation2 + $0x10] sm:$0xff] %vm438, %v408
          %442 = vst.msk [vmem:[#allocation2 + $0x18] sm:$0xff] %vm438, %v409
          %443 = vst.msk [vmem:[#allocation2 + $0x20] sm:$0xff] %vm438, %v410
          %444 = vst.msk [vmem:[#allocation2 + $0x28] sm:$0xff] %vm438, %v411
          %445 = vst.msk [vmem:[#allocation2 + $0x30] sm:$0xff] %vm438, %v412
          %446 = vst.msk [vmem:[#allocation2 + $0x38] sm:$0xff] %vm438, %v413
          %447 = vst.msk [vmem:[#allocation2 + $0x40] sm:$0xff] %vm438, %v414
          %448 = vst.msk [vmem:[#allocation2 + $0x48] sm:$0xff] %vm438, %v415
          %449 = vst.msk [vmem:[#allocation2 + $0x50] sm:$0xff] %vm438, %v416
          %450 = vst.msk [vmem:[#allocation2 + $0x58] sm:$0xff] %vm438, %v417
          %451 = vst.msk [vmem:[#allocation2 + $0x60] sm:$0xff] %vm438, %v418
          %452 = vst.msk [vmem:[#allocation2 + $0x68] sm:$0xff] %vm438, %v419
          %453 = vst.msk [vmem:[#allocation2 + $0x70] sm:$0xff] %vm438, %v420
          %454 = vst.msk [vmem:[#allocation2 + $0x78] sm:$0xff] %vm438, %v421
          %455 = vst.msk [vmem:[#allocation2 + $0x80] sm:$0xff] %vm438, %v422
          %456 = vst.msk [vmem:[#allocation2 + $0x88] sm:$0xff] %vm438, %v423
          %457 = vst.msk [vmem:[#allocation2 + $0x90] sm:$0xff] %vm438, %v424
          %458 = vst.msk [vmem:[#allocation2 + $0x98] sm:$0xff] %vm438, %v425
          %459 = vst.msk [vmem:[#allocation2 + $0xa0] sm:$0xff] %vm438, %v426
          %460 = vst.msk [vmem:[#allocation2 + $0xa8] sm:$0xff] %vm438, %v427
          %461 = vst.msk [vmem:[#allocation2 + $0xb0] sm:$0xff] %vm438, %v428
          %462 = vst.msk [vmem:[#allocation2 + $0xb8] sm:$0xff] %vm438, %v429
          %463 = vst.msk [vmem:[#allocation2 + $0xc0] sm:$0xff] %vm438, %v430
          %464 = vst.msk [vmem:[#allocation2 + $0xc8] sm:$0xff] %vm438, %v431
          %465 = vst.msk [vmem:[#allocation2 + $0xd0] sm:$0xff] %vm438, %v432
          %466 = vst.msk [vmem:[#allocation2 + $0xd8] sm:$0xff] %vm438, %v433
          %467 = vst.msk [vmem:[#allocation2 + $0xe0] sm:$0xff] %vm438, %v434
          %468 = vst.msk [vmem:[#allocation2 + $0xe8] sm:$0xff] %vm438, %v435
          %469 = vst.msk [vmem:[#allocation2 + $0xf0] sm:$0xff] %vm438, %v436
          %470 = vst.msk [vmem:[#allocation2 + $0xf8] sm:$0xff] %vm438, %v437
        $region48: #{tpu_custom_call.1} parent=35 // pred_fallthru
          _
        %s471 = sld [smem:[#allocation5 + %s26]]
        %p472 = scmp.lt.s32.totalorder %s27, %s471
        // Predicated region
        $region49: #{tpu_custom_call.1} parent=35 // pred_check
          %p473 = pneg %p472
        $region50: #{tpu_custom_call.1} parent=35 // pred_check_branch
          %475 = sbr.rel (%p473) target = $region52
        $region51: #{tpu_custom_call.1} parent=35 // pred_region
          %s476 = sadd.s32 %s26, %s27
          %s477 = sld [smem:[#allocation6 + %s476]]
          %s478 = smul.u32 %s328, 256
          %s479 = smul.u32 %s477, 256
          %s480 = sadd.s32 %s478, %s479
          %v481 = vld [vmem:[#allocation2] sm:$0xff]
          %v482 = vld [vmem:[#allocation2 + $0x8] sm:$0xff]
          %v483 = vld [vmem:[#allocation2 + $0x10] sm:$0xff]
          %v484 = vld [vmem:[#allocation2 + $0x18] sm:$0xff]
          %v485 = vld [vmem:[#allocation2 + $0x20] sm:$0xff]
          %v486 = vld [vmem:[#allocation2 + $0x28] sm:$0xff]
          %v487 = vld [vmem:[#allocation2 + $0x30] sm:$0xff]
          %v488 = vld [vmem:[#allocation2 + $0x38] sm:$0xff]
          %v489 = vld [vmem:[#allocation2 + $0x40] sm:$0xff]
          %v490 = vld [vmem:[#allocation2 + $0x48] sm:$0xff]
          %v491 = vld [vmem:[#allocation2 + $0x50] sm:$0xff]
          %v492 = vld [vmem:[#allocation2 + $0x58] sm:$0xff]
          %v493 = vld [vmem:[#allocation2 + $0x60] sm:$0xff]
          %v494 = vld [vmem:[#allocation2 + $0x68] sm:$0xff]
          %v495 = vld [vmem:[#allocation2 + $0x70] sm:$0xff]
          %v496 = vld [vmem:[#allocation2 + $0x78] sm:$0xff]
          %v497 = vld [vmem:[#allocation2 + $0x80] sm:$0xff]
          %v498 = vld [vmem:[#allocation2 + $0x88] sm:$0xff]
          %v499 = vld [vmem:[#allocation2 + $0x90] sm:$0xff]
          %v500 = vld [vmem:[#allocation2 + $0x98] sm:$0xff]
          %v501 = vld [vmem:[#allocation2 + $0xa0] sm:$0xff]
          %v502 = vld [vmem:[#allocation2 + $0xa8] sm:$0xff]
          %v503 = vld [vmem:[#allocation2 + $0xb0] sm:$0xff]
          %v504 = vld [vmem:[#allocation2 + $0xb8] sm:$0xff]
          %v505 = vld [vmem:[#allocation2 + $0xc0] sm:$0xff]
          %v506 = vld [vmem:[#allocation2 + $0xc8] sm:$0xff]
          %v507 = vld [vmem:[#allocation2 + $0xd0] sm:$0xff]
          %v508 = vld [vmem:[#allocation2 + $0xd8] sm:$0xff]
          %v509 = vld [vmem:[#allocation2 + $0xe0] sm:$0xff]
          %v510 = vld [vmem:[#allocation2 + $0xe8] sm:$0xff]
          %v511 = vld [vmem:[#allocation2 + $0xf0] sm:$0xff]
          %v512 = vld [vmem:[#allocation2 + $0xf8] sm:$0xff]
          %v513 = vld [vmem:[%s292] sm:$0xff]
          %v514 = vld [vmem:[%s292 + $0x8] sm:$0xff]
          %v515 = vld [vmem:[%s292 + $0x10] sm:$0xff]
          %v516 = vld [vmem:[%s292 + $0x18] sm:$0xff]
          %v517 = vld [vmem:[%s292 + $0x20] sm:$0xff]
          %v518 = vld [vmem:[%s292 + $0x28] sm:$0xff]
          %v519 = vld [vmem:[%s292 + $0x30] sm:$0xff]
          %v520 = vld [vmem:[%s292 + $0x38] sm:$0xff]
          %v521 = vld [vmem:[%s292 + $0x40] sm:$0xff]
          %v522 = vld [vmem:[%s292 + $0x48] sm:$0xff]
          %v523 = vld [vmem:[%s292 + $0x50] sm:$0xff]
          %v524 = vld [vmem:[%s292 + $0x58] sm:$0xff]
          %v525 = vld [vmem:[%s292 + $0x60] sm:$0xff]
          %v526 = vld [vmem:[%s292 + $0x68] sm:$0xff]
          %v527 = vld [vmem:[%s292 + $0x70] sm:$0xff]
          %v528 = vld [vmem:[%s292 + $0x78] sm:$0xff]
          %v529 = vld [vmem:[%s292 + $0x80] sm:$0xff]
          %v530 = vld [vmem:[%s292 + $0x88] sm:$0xff]
          %v531 = vld [vmem:[%s292 + $0x90] sm:$0xff]
          %v532 = vld [vmem:[%s292 + $0x98] sm:$0xff]
          %v533 = vld [vmem:[%s292 + $0xa0] sm:$0xff]
          %v534 = vld [vmem:[%s292 + $0xa8] sm:$0xff]
          %v535 = vld [vmem:[%s292 + $0xb0] sm:$0xff]
          %v536 = vld [vmem:[%s292 + $0xb8] sm:$0xff]
          %v537 = vld [vmem:[%s292 + $0xc0] sm:$0xff]
          %v538 = vld [vmem:[%s292 + $0xc8] sm:$0xff]
          %v539 = vld [vmem:[%s292 + $0xd0] sm:$0xff]
          %v540 = vld [vmem:[%s292 + $0xd8] sm:$0xff]
          %v541 = vld [vmem:[%s292 + $0xe0] sm:$0xff]
          %v542 = vld [vmem:[%s292 + $0xe8] sm:$0xff]
          %v543 = vld [vmem:[%s292 + $0xf0] sm:$0xff]
          %v544 = vld [vmem:[%s292 + $0xf8] sm:$0xff]
          %s545 = sshra.s32 %s480, 3
          %s546 = sand.u32 %s480, 7
          %s547 = smul.addr %s545, 4
          %s548 = scalar_lea.vmem [#allocation3], %s547
          %v549 = vld [vmem:[%s548] sm:$0xf]
          %v550 = vld [vmem:[%s548 + $0x4] sm:$0xf]
          %v551 = vld [vmem:[%s548 + $0x8] sm:$0xf]
          %v552 = vld [vmem:[%s548 + $0xc] sm:$0xf]
          %v553 = vld [vmem:[%s548 + $0x10] sm:$0xf]
          %v554 = vld [vmem:[%s548 + $0x14] sm:$0xf]
          %v555 = vld [vmem:[%s548 + $0x18] sm:$0xf]
          %v556 = vld [vmem:[%s548 + $0x1c] sm:$0xf]
          %v557 = vld [vmem:[%s548 + $0x20] sm:$0xf]
          %v558 = vld [vmem:[%s548 + $0x24] sm:$0xf]
          %v559 = vld [vmem:[%s548 + $0x28] sm:$0xf]
          %v560 = vld [vmem:[%s548 + $0x2c] sm:$0xf]
          %v561 = vld [vmem:[%s548 + $0x30] sm:$0xf]
          %v562 = vld [vmem:[%s548 + $0x34] sm:$0xf]
          %v563 = vld [vmem:[%s548 + $0x38] sm:$0xf]
          %v564 = vld [vmem:[%s548 + $0x3c] sm:$0xf]
          %v565 = vld [vmem:[%s548 + $0x40] sm:$0xf]
          %v566 = vld [vmem:[%s548 + $0x44] sm:$0xf]
          %v567 = vld [vmem:[%s548 + $0x48] sm:$0xf]
          %v568 = vld [vmem:[%s548 + $0x4c] sm:$0xf]
          %v569 = vld [vmem:[%s548 + $0x50] sm:$0xf]
          %v570 = vld [vmem:[%s548 + $0x54] sm:$0xf]
          %v571 = vld [vmem:[%s548 + $0x58] sm:$0xf]
          %v572 = vld [vmem:[%s548 + $0x5c] sm:$0xf]
          %v573 = vld [vmem:[%s548 + $0x60] sm:$0xf]
          %v574 = vld [vmem:[%s548 + $0x64] sm:$0xf]
          %v575 = vld [vmem:[%s548 + $0x68] sm:$0xf]
          %v576 = vld [vmem:[%s548 + $0x6c] sm:$0xf]
          %v577 = vld [vmem:[%s548 + $0x70] sm:$0xf]
          %v578 = vld [vmem:[%s548 + $0x74] sm:$0xf]
          %v579 = vld [vmem:[%s548 + $0x78] sm:$0xf]
          %v580 = vld [vmem:[%s548 + $0x7c] sm:$0xf]
          %v613 = vunpack.c.l.b16 %v513
          %v614 = vunpack.c.h.b16 %v513
          %v615 = vunpack.c.l.b16 %v514
          %v616 = vunpack.c.h.b16 %v514
          %v617 = vunpack.c.l.b16 %v515
          %v618 = vunpack.c.h.b16 %v515
          %v619 = vunpack.c.l.b16 %v516
          %v620 = vunpack.c.h.b16 %v516
          %v621 = vunpack.c.l.b16 %v517
          %v622 = vunpack.c.h.b16 %v517
          %v623 = vunpack.c.l.b16 %v518
          %v624 = vunpack.c.h.b16 %v518
          %v625 = vunpack.c.l.b16 %v519
          %v626 = vunpack.c.h.b16 %v519
          %v627 = vunpack.c.l.b16 %v520
          %v628 = vunpack.c.h.b16 %v520
          %v629 = vunpack.c.l.b16 %v521
          %v630 = vunpack.c.h.b16 %v521
          %v631 = vunpack.c.l.b16 %v522
          %v632 = vunpack.c.h.b16 %v522
          %v633 = vunpack.c.l.b16 %v523
          %v634 = vunpack.c.h.b16 %v523
          %v635 = vunpack.c.l.b16 %v524
          %v636 = vunpack.c.h.b16 %v524
          %v637 = vunpack.c.l.b16 %v525
          %v638 = vunpack.c.h.b16 %v525
          %v639 = vunpack.c.l.b16 %v526
          %v640 = vunpack.c.h.b16 %v526
          %v641 = vunpack.c.l.b16 %v527
          %v642 = vunpack.c.h.b16 %v527
          %v643 = vunpack.c.l.b16 %v528
          %v644 = vunpack.c.h.b16 %v528
          %v645 = vunpack.c.l.b16 %v529
          %v646 = vunpack.c.h.b16 %v529
          %v647 = vunpack.c.l.b16 %v530
          %v648 = vunpack.c.h.b16 %v530
          %v649 = vunpack.c.l.b16 %v531
          %v650 = vunpack.c.h.b16 %v531
          %v651 = vunpack.c.l.b16 %v532
          %v652 = vunpack.c.h.b16 %v532
          %v653 = vunpack.c.l.b16 %v533
          %v654 = vunpack.c.h.b16 %v533
          %v655 = vunpack.c.l.b16 %v534
          %v656 = vunpack.c.h.b16 %v534
          %v657 = vunpack.c.l.b16 %v535
          %v658 = vunpack.c.h.b16 %v535
          %v659 = vunpack.c.l.b16 %v536
          %v660 = vunpack.c.h.b16 %v536
          %v661 = vunpack.c.l.b16 %v537
          %v662 = vunpack.c.h.b16 %v537
          %v663 = vunpack.c.l.b16 %v538
          %v664 = vunpack.c.h.b16 %v538
          %v665 = vunpack.c.l.b16 %v539
          %v666 = vunpack.c.h.b16 %v539
          %v667 = vunpack.c.l.b16 %v540
          %v668 = vunpack.c.h.b16 %v540
          %v669 = vunpack.c.l.b16 %v541
          %v670 = vunpack.c.h.b16 %v541
          %v671 = vunpack.c.l.b16 %v542
          %v672 = vunpack.c.h.b16 %v542
          %v673 = vunpack.c.l.b16 %v543
          %v674 = vunpack.c.h.b16 %v543
          %v675 = vunpack.c.l.b16 %v544
          %v676 = vunpack.c.h.b16 %v544
          %v677 = vpack.c.b16 %v615, %v613
          %v678 = vpack.c.b16 %v616, %v614
          %v679 = vpack.c.b16 %v619, %v617
          %v680 = vpack.c.b16 %v620, %v618
          %v681 = vpack.c.b16 %v623, %v621
          %v682 = vpack.c.b16 %v624, %v622
          %v683 = vpack.c.b16 %v627, %v625
          %v684 = vpack.c.b16 %v628, %v626
          %v685 = vpack.c.b16 %v631, %v629
          %v686 = vpack.c.b16 %v632, %v630
          %v687 = vpack.c.b16 %v635, %v633
          %v688 = vpack.c.b16 %v636, %v634
          %v689 = vpack.c.b16 %v639, %v637
          %v690 = vpack.c.b16 %v640, %v638
          %v691 = vpack.c.b16 %v643, %v641
          %v692 = vpack.c.b16 %v644, %v642
          %v693 = vpack.c.b16 %v647, %v645
          %v694 = vpack.c.b16 %v648, %v646
          %v695 = vpack.c.b16 %v651, %v649
          %v696 = vpack.c.b16 %v652, %v650
          %v697 = vpack.c.b16 %v655, %v653
          %v698 = vpack.c.b16 %v656, %v654
          %v699 = vpack.c.b16 %v659, %v657
          %v700 = vpack.c.b16 %v660, %v658
          %v701 = vpack.c.b16 %v663, %v661
          %v702 = vpack.c.b16 %v664, %v662
          %v703 = vpack.c.b16 %v667, %v665
          %v704 = vpack.c.b16 %v668, %v666
          %v705 = vpack.c.b16 %v671, %v669
          %v706 = vpack.c.b16 %v672, %v670
          %v707 = vpack.c.b16 %v675, %v673
          %v708 = vpack.c.b16 %v676, %v674
          %v773 = vunpack.c.l.b16 %v549
          %v774 = vunpack.c.l.b16 %v550
          %v775 = vunpack.c.l.b16 %v551
          %v776 = vunpack.c.l.b16 %v552
          %v777 = vunpack.c.l.b16 %v553
          %v778 = vunpack.c.l.b16 %v554
          %v779 = vunpack.c.l.b16 %v555
          %v780 = vunpack.c.l.b16 %v556
          %v781 = vunpack.c.l.b16 %v557
          %v782 = vunpack.c.l.b16 %v558
          %v783 = vunpack.c.l.b16 %v559
          %v784 = vunpack.c.l.b16 %v560
          %v785 = vunpack.c.l.b16 %v561
          %v786 = vunpack.c.l.b16 %v562
          %v787 = vunpack.c.l.b16 %v563
          %v788 = vunpack.c.l.b16 %v564
          %v789 = vunpack.c.l.b16 %v565
          %v790 = vunpack.c.l.b16 %v566
          %v791 = vunpack.c.l.b16 %v567
          %v792 = vunpack.c.l.b16 %v568
          %v793 = vunpack.c.l.b16 %v569
          %v794 = vunpack.c.l.b16 %v570
          %v795 = vunpack.c.l.b16 %v571
          %v796 = vunpack.c.l.b16 %v572
          %v797 = vunpack.c.l.b16 %v573
          %v798 = vunpack.c.l.b16 %v574
          %v799 = vunpack.c.l.b16 %v575
          %v800 = vunpack.c.l.b16 %v576
          %v801 = vunpack.c.l.b16 %v577
          %v802 = vunpack.c.l.b16 %v578
          %v803 = vunpack.c.l.b16 %v579
          %v804 = vunpack.c.l.b16 %v580
          %v805 = vpack.c.b16 %v774, %v773
          %v806 = vpack.c.b16 %v776, %v775
          %v807 = vpack.c.b16 %v778, %v777
          %v808 = vpack.c.b16 %v780, %v779
          %v809 = vpack.c.b16 %v782, %v781
          %v810 = vpack.c.b16 %v784, %v783
          %v811 = vpack.c.b16 %v786, %v785
          %v812 = vpack.c.b16 %v788, %v787
          %v813 = vpack.c.b16 %v790, %v789
          %v814 = vpack.c.b16 %v792, %v791
          %v815 = vpack.c.b16 %v794, %v793
          %v816 = vpack.c.b16 %v796, %v795
          %v817 = vpack.c.b16 %v798, %v797
          %v818 = vpack.c.b16 %v800, %v799
          %v819 = vpack.c.b16 %v802, %v801
          %v820 = vpack.c.b16 %v804, %v803
          %837 = vmatpush.bf16.msra.mxu0 %v812
          %838 = vmatpush.bf16.msra.mxu0 %v811
          %839 = vmatpush.bf16.msra.mxu0 %v810
          %840 = vmatpush.bf16.msra.mxu0 %v809
          %841 = vmatpush.bf16.msra.mxu0 %v808
          %842 = vmatpush.bf16.msra.mxu0 %v807
          %843 = vmatpush.bf16.msra.mxu0 %v806
          %844 = vmatpush.bf16.msra.mxu0 %v805
          %845 = vmatmul.bf16.gmra.mxu0 %v677
          %v846 = vpop.f32.mrf.mxu0
          %v847 = vadd.f32 0.0, %v846
          %v848 = vpop.f32.mrf.mxu0
          %v849 = vadd.f32 0.0, %v848
          %850 = vmatmul.bf16.gmra.mxu0 %v679
          %v851 = vpop.f32.mrf.mxu0
          %v852 = vadd.f32 0.0, %v851
          %v853 = vpop.f32.mrf.mxu0
          %v854 = vadd.f32 0.0, %v853
          %855 = vmatmul.bf16.gmra.mxu0 %v681
          %v856 = vpop.f32.mrf.mxu0
          %v857 = vadd.f32 0.0, %v856
          %v858 = vpop.f32.mrf.mxu0
          %v859 = vadd.f32 0.0, %v858
          %860 = vmatmul.bf16.gmra.mxu0 %v683
          %v861 = vpop.f32.mrf.mxu0
          %v862 = vadd.f32 0.0, %v861
          %v863 = vpop.f32.mrf.mxu0
          %v864 = vadd.f32 0.0, %v863
          %865 = vmatmul.bf16.gmra.mxu0 %v685
          %v866 = vpop.f32.mrf.mxu0
          %v867 = vadd.f32 0.0, %v866
          %v868 = vpop.f32.mrf.mxu0
          %v869 = vadd.f32 0.0, %v868
          %870 = vmatmul.bf16.gmra.mxu0 %v687
          %v871 = vpop.f32.mrf.mxu0
          %v872 = vadd.f32 0.0, %v871
          %v873 = vpop.f32.mrf.mxu0
          %v874 = vadd.f32 0.0, %v873
          %875 = vmatmul.bf16.gmra.mxu0 %v689
          %v876 = vpop.f32.mrf.mxu0
          %v877 = vadd.f32 0.0, %v876
          %v878 = vpop.f32.mrf.mxu0
          %v879 = vadd.f32 0.0, %v878
          %880 = vmatmul.bf16.gmra.mxu0 %v691
          %v881 = vpop.f32.mrf.mxu0
          %v882 = vadd.f32 0.0, %v881
          %v883 = vpop.f32.mrf.mxu0
          %v884 = vadd.f32 0.0, %v883
          %885 = vmatmul.bf16.gmra.mxu0 %v693
          %v886 = vpop.f32.mrf.mxu0
          %v887 = vadd.f32 0.0, %v886
          %v888 = vpop.f32.mrf.mxu0
          %v889 = vadd.f32 0.0, %v888
          %890 = vmatmul.bf16.gmra.mxu0 %v695
          %v891 = vpop.f32.mrf.mxu0
          %v892 = vadd.f32 0.0, %v891
          %v893 = vpop.f32.mrf.mxu0
          %v894 = vadd.f32 0.0, %v893
          %895 = vmatmul.bf16.gmra.mxu0 %v697
          %v896 = vpop.f32.mrf.mxu0
          %v897 = vadd.f32 0.0, %v896
          %v898 = vpop.f32.mrf.mxu0
          %v899 = vadd.f32 0.0, %v898
          %900 = vmatmul.bf16.gmra.mxu0 %v699
          %v901 = vpop.f32.mrf.mxu0
          %v902 = vadd.f32 0.0, %v901
          %v903 = vpop.f32.mrf.mxu0
          %v904 = vadd.f32 0.0, %v903
          %905 = vmatmul.bf16.gmra.mxu0 %v701
          %v906 = vpop.f32.mrf.mxu0
          %v907 = vadd.f32 0.0, %v906
          %v908 = vpop.f32.mrf.mxu0
          %v909 = vadd.f32 0.0, %v908
          %910 = vmatmul.bf16.gmra.mxu0 %v703
          %v911 = vpop.f32.mrf.mxu0
          %v912 = vadd.f32 0.0, %v911
          %v913 = vpop.f32.mrf.mxu0
          %v914 = vadd.f32 0.0, %v913
          %915 = vmatmul.bf16.gmra.mxu0 %v705
          %v916 = vpop.f32.mrf.mxu0
          %v917 = vadd.f32 0.0, %v916
          %v918 = vpop.f32.mrf.mxu0
          %v919 = vadd.f32 0.0, %v918
          %920 = vmatmul.bf16.gmra.mxu0 %v707
          %v921 = vpop.f32.mrf.mxu0
          %v922 = vadd.f32 0.0, %v921
          %v923 = vpop.f32.mrf.mxu0
          %v924 = vadd.f32 0.0, %v923
          %925 = vdwg.mxu0
          %926 = vmatpush.bf16.msra.mxu0 %v820
          %927 = vmatpush.bf16.msra.mxu0 %v819
          %928 = vmatpush.bf16.msra.mxu0 %v818
          %929 = vmatpush.bf16.msra.mxu0 %v817
          %930 = vmatpush.bf16.msra.mxu0 %v816
          %931 = vmatpush.bf16.msra.mxu0 %v815
          %932 = vmatpush.bf16.msra.mxu0 %v814
          %933 = vmatpush.bf16.msra.mxu0 %v813
          %934 = vmatmul.bf16.gmra.mxu0 %v678
          %v935 = vpop.f32.mrf.mxu0
          %v936 = vadd.f32 %v847, %v935
          %v937 = vpop.f32.mrf.mxu0
          %v938 = vadd.f32 %v849, %v937
          %939 = vmatmul.bf16.gmra.mxu0 %v680
          %v940 = vpop.f32.mrf.mxu0
          %v941 = vadd.f32 %v852, %v940
          %v942 = vpop.f32.mrf.mxu0
          %v943 = vadd.f32 %v854, %v942
          %944 = vmatmul.bf16.gmra.mxu0 %v682
          %v945 = vpop.f32.mrf.mxu0
          %v946 = vadd.f32 %v857, %v945
          %v947 = vpop.f32.mrf.mxu0
          %v948 = vadd.f32 %v859, %v947
          %949 = vmatmul.bf16.gmra.mxu0 %v684
          %v950 = vpop.f32.mrf.mxu0
          %v951 = vadd.f32 %v862, %v950
          %v952 = vpop.f32.mrf.mxu0
          %v953 = vadd.f32 %v864, %v952
          %954 = vmatmul.bf16.gmra.mxu0 %v686
          %v955 = vpop.f32.mrf.mxu0
          %v956 = vadd.f32 %v867, %v955
          %v957 = vpop.f32.mrf.mxu0
          %v958 = vadd.f32 %v869, %v957
          %959 = vmatmul.bf16.gmra.mxu0 %v688
          %v960 = vpop.f32.mrf.mxu0
          %v961 = vadd.f32 %v872, %v960
          %v962 = vpop.f32.mrf.mxu0
          %v963 = vadd.f32 %v874, %v962
          %964 = vmatmul.bf16.gmra.mxu0 %v690
          %v965 = vpop.f32.mrf.mxu0
          %v966 = vadd.f32 %v877, %v965
          %v967 = vpop.f32.mrf.mxu0
          %v968 = vadd.f32 %v879, %v967
          %969 = vmatmul.bf16.gmra.mxu0 %v692
          %v970 = vpop.f32.mrf.mxu0
          %v971 = vadd.f32 %v882, %v970
          %v972 = vpop.f32.mrf.mxu0
          %v973 = vadd.f32 %v884, %v972
          %974 = vmatmul.bf16.gmra.mxu0 %v694
          %v975 = vpop.f32.mrf.mxu0
          %v976 = vadd.f32 %v887, %v975
          %v977 = vpop.f32.mrf.mxu0
          %v978 = vadd.f32 %v889, %v977
          %979 = vmatmul.bf16.gmra.mxu0 %v696
          %v980 = vpop.f32.mrf.mxu0
          %v981 = vadd.f32 %v892, %v980
          %v982 = vpop.f32.mrf.mxu0
          %v983 = vadd.f32 %v894, %v982
          %984 = vmatmul.bf16.gmra.mxu0 %v698
          %v985 = vpop.f32.mrf.mxu0
          %v986 = vadd.f32 %v897, %v985
          %v987 = vpop.f32.mrf.mxu0
          %v988 = vadd.f32 %v899, %v987
          %989 = vmatmul.bf16.gmra.mxu0 %v700
          %v990 = vpop.f32.mrf.mxu0
          %v991 = vadd.f32 %v902, %v990
          %v992 = vpop.f32.mrf.mxu0
          %v993 = vadd.f32 %v904, %v992
          %994 = vmatmul.bf16.gmra.mxu0 %v702
          %v995 = vpop.f32.mrf.mxu0
          %v996 = vadd.f32 %v907, %v995
          %v997 = vpop.f32.mrf.mxu0
          %v998 = vadd.f32 %v909, %v997
          %999 = vmatmul.bf16.gmra.mxu0 %v704
          %v1000 = vpop.f32.mrf.mxu0
          %v1001 = vadd.f32 %v912, %v1000
          %v1002 = vpop.f32.mrf.mxu0
          %v1003 = vadd.f32 %v914, %v1002
          %1004 = vmatmul.bf16.gmra.mxu0 %v706
          %v1005 = vpop.f32.mrf.mxu0
          %v1006 = vadd.f32 %v917, %v1005
          %v1007 = vpop.f32.mrf.mxu0
          %v1008 = vadd.f32 %v919, %v1007
          %1009 = vmatmul.bf16.gmra.mxu0 %v708
          %v1010 = vpop.f32.mrf.mxu0
          %v1011 = vadd.f32 %v922, %v1010
          %v1012 = vpop.f32.mrf.mxu0
          %v1013 = vadd.f32 %v924, %v1012
          %1014 = vdwg.mxu0
          %v1015 = vadd.f32 %v481, %v936
          %v1016 = vadd.f32 %v482, %v938
          %v1017 = vadd.f32 %v483, %v941
          %v1018 = vadd.f32 %v484, %v943
          %v1019 = vadd.f32 %v485, %v946
          %v1020 = vadd.f32 %v486, %v948
          %v1021 = vadd.f32 %v487, %v951
          %v1022 = vadd.f32 %v488, %v953
          %v1023 = vadd.f32 %v489, %v956
          %v1024 = vadd.f32 %v490, %v958
          %v1025 = vadd.f32 %v491, %v961
          %v1026 = vadd.f32 %v492, %v963
          %v1027 = vadd.f32 %v493, %v966
          %v1028 = vadd.f32 %v494, %v968
          %v1029 = vadd.f32 %v495, %v971
          %v1030 = vadd.f32 %v496, %v973
          %v1031 = vadd.f32 %v497, %v976
          %v1032 = vadd.f32 %v498, %v978
          %v1033 = vadd.f32 %v499, %v981
          %v1034 = vadd.f32 %v500, %v983
          %v1035 = vadd.f32 %v501, %v986
          %v1036 = vadd.f32 %v502, %v988
          %v1037 = vadd.f32 %v503, %v991
          %v1038 = vadd.f32 %v504, %v993
          %v1039 = vadd.f32 %v505, %v996
          %v1040 = vadd.f32 %v506, %v998
          %v1041 = vadd.f32 %v507, %v1001
          %v1042 = vadd.f32 %v508, %v1003
          %v1043 = vadd.f32 %v509, %v1006
          %v1044 = vadd.f32 %v510, %v1008
          %v1045 = vadd.f32 %v511, %v1011
          %v1046 = vadd.f32 %v512, %v1013
          %vm1047 = vcmask 31744
          %1048 = vst.msk [vmem:[#allocation2] sm:$0xff] %vm1047, %v1015
          %1049 = vst.msk [vmem:[#allocation2 + $0x8] sm:$0xff] %vm1047, %v1016
          %1050 = vst.msk [vmem:[#allocation2 + $0x10] sm:$0xff] %vm1047, %v1017
          %1051 = vst.msk [vmem:[#allocation2 + $0x18] sm:$0xff] %vm1047, %v1018
          %1052 = vst.msk [vmem:[#allocation2 + $0x20] sm:$0xff] %vm1047, %v1019
          %1053 = vst.msk [vmem:[#allocation2 + $0x28] sm:$0xff] %vm1047, %v1020
          %1054 = vst.msk [vmem:[#allocation2 + $0x30] sm:$0xff] %vm1047, %v1021
          %1055 = vst.msk [vmem:[#allocation2 + $0x38] sm:$0xff] %vm1047, %v1022
          %1056 = vst.msk [vmem:[#allocation2 + $0x40] sm:$0xff] %vm1047, %v1023
          %1057 = vst.msk [vmem:[#allocation2 + $0x48] sm:$0xff] %vm1047, %v1024
          %1058 = vst.msk [vmem:[#allocation2 + $0x50] sm:$0xff] %vm1047, %v1025
          %1059 = vst.msk [vmem:[#allocation2 + $0x58] sm:$0xff] %vm1047, %v1026
          %1060 = vst.msk [vmem:[#allocation2 + $0x60] sm:$0xff] %vm1047, %v1027
          %1061 = vst.msk [vmem:[#allocation2 + $0x68] sm:$0xff] %vm1047, %v1028
          %1062 = vst.msk [vmem:[#allocation2 + $0x70] sm:$0xff] %vm1047, %v1029
          %1063 = vst.msk [vmem:[#allocation2 + $0x78] sm:$0xff] %vm1047, %v1030
          %1064 = vst.msk [vmem:[#allocation2 + $0x80] sm:$0xff] %vm1047, %v1031
          %1065 = vst.msk [vmem:[#allocation2 + $0x88] sm:$0xff] %vm1047, %v1032
          %1066 = vst.msk [vmem:[#allocation2 + $0x90] sm:$0xff] %vm1047, %v1033
          %1067 = vst.msk [vmem:[#allocation2 + $0x98] sm:$0xff] %vm1047, %v1034
          %1068 = vst.msk [vmem:[#allocation2 + $0xa0] sm:$0xff] %vm1047, %v1035
          %1069 = vst.msk [vmem:[#allocation2 + $0xa8] sm:$0xff] %vm1047, %v1036
          %1070 = vst.msk [vmem:[#allocation2 + $0xb0] sm:$0xff] %vm1047, %v1037
          %1071 = vst.msk [vmem:[#allocation2 + $0xb8] sm:$0xff] %vm1047, %v1038
          %1072 = vst.msk [vmem:[#allocation2 + $0xc0] sm:$0xff] %vm1047, %v1039
          %1073 = vst.msk [vmem:[#allocation2 + $0xc8] sm:$0xff] %vm1047, %v1040
          %1074 = vst.msk [vmem:[#allocation2 + $0xd0] sm:$0xff] %vm1047, %v1041
          %1075 = vst.msk [vmem:[#allocation2 + $0xd8] sm:$0xff] %vm1047, %v1042
          %1076 = vst.msk [vmem:[#allocation2 + $0xe0] sm:$0xff] %vm1047, %v1043
          %1077 = vst.msk [vmem:[#allocation2 + $0xe8] sm:$0xff] %vm1047, %v1044
          %1078 = vst.msk [vmem:[#allocation2 + $0xf0] sm:$0xff] %vm1047, %v1045
          %1079 = vst.msk [vmem:[#allocation2 + $0xf8] sm:$0xff] %vm1047, %v1046
        $region52: #{tpu_custom_call.1} parent=35 // pred_fallthru
          _
        %p1080 = scmp.lt.s32.totalorder %s25, 2
        %p1081 = pnand %p333, %p1080
        %p1082 = pneg %p1081
        // Predicated region
        $region53: #{tpu_custom_call.1} parent=35 // pred_check
          _
        $region54: #{tpu_custom_call.1} parent=35 // pred_check_branch
          %1084 = sbr.rel (%p1081) target = $region56
        $region55: #{tpu_custom_call.1} parent=35 // pred_region
          %s1085 = ssub.s32 1, %s328
          %s1086 = smul.u32 %s1085, 256
          %s1087 = smul.u32 %s26, 256
          %s1088 = sadd.s32 %s1086, %s1087
          %v1089 = vld [vmem:[#allocation2] sm:$0xff]
          %v1090 = vld [vmem:[#allocation2 + $0x8] sm:$0xff]
          %v1091 = vld [vmem:[#allocation2 + $0x10] sm:$0xff]
          %v1092 = vld [vmem:[#allocation2 + $0x18] sm:$0xff]
          %v1093 = vld [vmem:[#allocation2 + $0x20] sm:$0xff]
          %v1094 = vld [vmem:[#allocation2 + $0x28] sm:$0xff]
          %v1095 = vld [vmem:[#allocation2 + $0x30] sm:$0xff]
          %v1096 = vld [vmem:[#allocation2 + $0x38] sm:$0xff]
          %v1097 = vld [vmem:[#allocation2 + $0x40] sm:$0xff]
          %v1098 = vld [vmem:[#allocation2 + $0x48] sm:$0xff]
          %v1099 = vld [vmem:[#allocation2 + $0x50] sm:$0xff]
          %v1100 = vld [vmem:[#allocation2 + $0x58] sm:$0xff]
          %v1101 = vld [vmem:[#allocation2 + $0x60] sm:$0xff]
          %v1102 = vld [vmem:[#allocation2 + $0x68] sm:$0xff]
          %v1103 = vld [vmem:[#allocation2 + $0x70] sm:$0xff]
          %v1104 = vld [vmem:[#allocation2 + $0x78] sm:$0xff]
          %v1105 = vld [vmem:[#allocation2 + $0x80] sm:$0xff]
          %v1106 = vld [vmem:[#allocation2 + $0x88] sm:$0xff]
          %v1107 = vld [vmem:[#allocation2 + $0x90] sm:$0xff]
          %v1108 = vld [vmem:[#allocation2 + $0x98] sm:$0xff]
          %v1109 = vld [vmem:[#allocation2 + $0xa0] sm:$0xff]
          %v1110 = vld [vmem:[#allocation2 + $0xa8] sm:$0xff]
          %v1111 = vld [vmem:[#allocation2 + $0xb0] sm:$0xff]
          %v1112 = vld [vmem:[#allocation2 + $0xb8] sm:$0xff]
          %v1113 = vld [vmem:[#allocation2 + $0xc0] sm:$0xff]
          %v1114 = vld [vmem:[#allocation2 + $0xc8] sm:$0xff]
          %v1115 = vld [vmem:[#allocation2 + $0xd0] sm:$0xff]
          %v1116 = vld [vmem:[#allocation2 + $0xd8] sm:$0xff]
          %v1117 = vld [vmem:[#allocation2 + $0xe0] sm:$0xff]
          %v1118 = vld [vmem:[#allocation2 + $0xe8] sm:$0xff]
          %v1119 = vld [vmem:[#allocation2 + $0xf0] sm:$0xff]
          %v1120 = vld [vmem:[#allocation2 + $0xf8] sm:$0xff]
          %v1121 = vpack.c.bf16 %v1089, %v1089
          %v1122 = vpack.c.bf16 %v1090, %v1090
          %v1123 = vpack.c.bf16 %v1091, %v1091
          %v1124 = vpack.c.bf16 %v1092, %v1092
          %v1125 = vpack.c.bf16 %v1093, %v1093
          %v1126 = vpack.c.bf16 %v1094, %v1094
          %v1127 = vpack.c.bf16 %v1095, %v1095
          %v1128 = vpack.c.bf16 %v1096, %v1096
          %v1129 = vpack.c.bf16 %v1097, %v1097
          %v1130 = vpack.c.bf16 %v1098, %v1098
          %v1131 = vpack.c.bf16 %v1099, %v1099
          %v1132 = vpack.c.bf16 %v1100, %v1100
          %v1133 = vpack.c.bf16 %v1101, %v1101
          %v1134 = vpack.c.bf16 %v1102, %v1102
          %v1135 = vpack.c.bf16 %v1103, %v1103
          %v1136 = vpack.c.bf16 %v1104, %v1104
          %v1137 = vpack.c.bf16 %v1105, %v1105
          %v1138 = vpack.c.bf16 %v1106, %v1106
          %v1139 = vpack.c.bf16 %v1107, %v1107
          %v1140 = vpack.c.bf16 %v1108, %v1108
          %v1141 = vpack.c.bf16 %v1109, %v1109
          %v1142 = vpack.c.bf16 %v1110, %v1110
          %v1143 = vpack.c.bf16 %v1111, %v1111
          %v1144 = vpack.c.bf16 %v1112, %v1112
          %v1145 = vpack.c.bf16 %v1113, %v1113
          %v1146 = vpack.c.bf16 %v1114, %v1114
          %v1147 = vpack.c.bf16 %v1115, %v1115
          %v1148 = vpack.c.bf16 %v1116, %v1116
          %v1149 = vpack.c.bf16 %v1117, %v1117
          %v1150 = vpack.c.bf16 %v1118, %v1118
          %v1151 = vpack.c.bf16 %v1119, %v1119
          %v1152 = vpack.c.bf16 %v1120, %v1120
          %s1153 = sshra.s32 %s1088, 3
          %s1154 = sand.u32 %s1088, 7
          %s1155 = smul.addr %s1153, 4
          %s1156 = scalar_lea.vmem [#allocation3], %s1155
          %vm1157 = vcmask 27648
          %1158 = vst.msk [vmem:[%s1156] sm:$0xf] %vm1157, %v1121
          %1159 = vst.msk [vmem:[%s1156 + $0x4] sm:$0xf] %vm1157, %v1122
          %1160 = vst.msk [vmem:[%s1156 + $0x8] sm:$0xf] %vm1157, %v1123
          %1161 = vst.msk [vmem:[%s1156 + $0xc] sm:$0xf] %vm1157, %v1124
          %1162 = vst.msk [vmem:[%s1156 + $0x10] sm:$0xf] %vm1157, %v1125
          %1163 = vst.msk [vmem:[%s1156 + $0x14] sm:$0xf] %vm1157, %v1126
          %1164 = vst.msk [vmem:[%s1156 + $0x18] sm:$0xf] %vm1157, %v1127
          %1165 = vst.msk [vmem:[%s1156 + $0x1c] sm:$0xf] %vm1157, %v1128
          %1166 = vst.msk [vmem:[%s1156 + $0x20] sm:$0xf] %vm1157, %v1129
          %1167 = vst.msk [vmem:[%s1156 + $0x24] sm:$0xf] %vm1157, %v1130
          %1168 = vst.msk [vmem:[%s1156 + $0x28] sm:$0xf] %vm1157, %v1131
          %1169 = vst.msk [vmem:[%s1156 + $0x2c] sm:$0xf] %vm1157, %v1132
          %1170 = vst.msk [vmem:[%s1156 + $0x30] sm:$0xf] %vm1157, %v1133
          %1171 = vst.msk [vmem:[%s1156 + $0x34] sm:$0xf] %vm1157, %v1134
          %1172 = vst.msk [vmem:[%s1156 + $0x38] sm:$0xf] %vm1157, %v1135
          %1173 = vst.msk [vmem:[%s1156 + $0x3c] sm:$0xf] %vm1157, %v1136
          %1174 = vst.msk [vmem:[%s1156 + $0x40] sm:$0xf] %vm1157, %v1137
          %1175 = vst.msk [vmem:[%s1156 + $0x44] sm:$0xf] %vm1157, %v1138
          %1176 = vst.msk [vmem:[%s1156 + $0x48] sm:$0xf] %vm1157, %v1139
          %1177 = vst.msk [vmem:[%s1156 + $0x4c] sm:$0xf] %vm1157, %v1140
          %1178 = vst.msk [vmem:[%s1156 + $0x50] sm:$0xf] %vm1157, %v1141
          %1179 = vst.msk [vmem:[%s1156 + $0x54] sm:$0xf] %vm1157, %v1142
          %1180 = vst.msk [vmem:[%s1156 + $0x58] sm:$0xf] %vm1157, %v1143
          %1181 = vst.msk [vmem:[%s1156 + $0x5c] sm:$0xf] %vm1157, %v1144
          %1182 = vst.msk [vmem:[%s1156 + $0x60] sm:$0xf] %vm1157, %v1145
          %1183 = vst.msk [vmem:[%s1156 + $0x64] sm:$0xf] %vm1157, %v1146
          %1184 = vst.msk [vmem:[%s1156 + $0x68] sm:$0xf] %vm1157, %v1147
          %1185 = vst.msk [vmem:[%s1156 + $0x6c] sm:$0xf] %vm1157, %v1148
          %1186 = vst.msk [vmem:[%s1156 + $0x70] sm:$0xf] %vm1157, %v1149
          %1187 = vst.msk [vmem:[%s1156 + $0x74] sm:$0xf] %vm1157, %v1150
          %1188 = vst.msk [vmem:[%s1156 + $0x78] sm:$0xf] %vm1157, %v1151
          %1189 = vst.msk [vmem:[%s1156 + $0x7c] sm:$0xf] %vm1157, %v1152
        $region56: #{tpu_custom_call.1} parent=35 // pred_fallthru
          _
        // Predicated region
        $region57: #{tpu_custom_call.1} parent=35 // pred_check
          %p1190 = pneg %p333
        $region58: #{tpu_custom_call.1} parent=35 // pred_check_branch
          %1192 = sbr.rel (%p1190) target = $region60
        $region59: #{tpu_custom_call.1} parent=35 // pred_region
          %v1193 = vld [vmem:[#allocation2] sm:$0xff]
          %v1194 = vld [vmem:[#allocation2 + $0x8] sm:$0xff]
          %v1195 = vld [vmem:[#allocation2 + $0x10] sm:$0xff]
          %v1196 = vld [vmem:[#allocation2 + $0x18] sm:$0xff]
          %v1197 = vld [vmem:[#allocation2 + $0x20] sm:$0xff]
          %v1198 = vld [vmem:[#allocation2 + $0x28] sm:$0xff]
          %v1199 = vld [vmem:[#allocation2 + $0x30] sm:$0xff]
          %v1200 = vld [vmem:[#allocation2 + $0x38] sm:$0xff]
          %v1201 = vld [vmem:[#allocation2 + $0x40] sm:$0xff]
          %v1202 = vld [vmem:[#allocation2 + $0x48] sm:$0xff]
          %v1203 = vld [vmem:[#allocation2 + $0x50] sm:$0xff]
          %v1204 = vld [vmem:[#allocation2 + $0x58] sm:$0xff]
          %v1205 = vld [vmem:[#allocation2 + $0x60] sm:$0xff]
          %v1206 = vld [vmem:[#allocation2 + $0x68] sm:$0xff]
          %v1207 = vld [vmem:[#allocation2 + $0x70] sm:$0xff]
          %v1208 = vld [vmem:[#allocation2 + $0x78] sm:$0xff]
          %v1209 = vld [vmem:[#allocation2 + $0x80] sm:$0xff]
          %v1210 = vld [vmem:[#allocation2 + $0x88] sm:$0xff]
          %v1211 = vld [vmem:[#allocation2 + $0x90] sm:$0xff]
          %v1212 = vld [vmem:[#allocation2 + $0x98] sm:$0xff]
          %v1213 = vld [vmem:[#allocation2 + $0xa0] sm:$0xff]
          %v1214 = vld [vmem:[#allocation2 + $0xa8] sm:$0xff]
          %v1215 = vld [vmem:[#allocation2 + $0xb0] sm:$0xff]
          %v1216 = vld [vmem:[#allocation2 + $0xb8] sm:$0xff]
          %v1217 = vld [vmem:[#allocation2 + $0xc0] sm:$0xff]
          %v1218 = vld [vmem:[#allocation2 + $0xc8] sm:$0xff]
          %v1219 = vld [vmem:[#allocation2 + $0xd0] sm:$0xff]
          %v1220 = vld [vmem:[#allocation2 + $0xd8] sm:$0xff]
          %v1221 = vld [vmem:[#allocation2 + $0xe0] sm:$0xff]
          %v1222 = vld [vmem:[#allocation2 + $0xe8] sm:$0xff]
          %v1223 = vld [vmem:[#allocation2 + $0xf0] sm:$0xff]
          %v1224 = vld [vmem:[#allocation2 + $0xf8] sm:$0xff]
          %v1225 = vmax.f32 %v1193, 0.0
          %v1226 = vmax.f32 %v1194, 0.0
          %v1227 = vmax.f32 %v1195, 0.0
          %v1228 = vmax.f32 %v1196, 0.0
          %v1229 = vmax.f32 %v1197, 0.0
          %v1230 = vmax.f32 %v1198, 0.0
          %v1231 = vmax.f32 %v1199, 0.0
          %v1232 = vmax.f32 %v1200, 0.0
          %v1233 = vmax.f32 %v1201, 0.0
          %v1234 = vmax.f32 %v1202, 0.0
          %v1235 = vmax.f32 %v1203, 0.0
          %v1236 = vmax.f32 %v1204, 0.0
          %v1237 = vmax.f32 %v1205, 0.0
          %v1238 = vmax.f32 %v1206, 0.0
          %v1239 = vmax.f32 %v1207, 0.0
          %v1240 = vmax.f32 %v1208, 0.0
          %v1241 = vmax.f32 %v1209, 0.0
          %v1242 = vmax.f32 %v1210, 0.0
          %v1243 = vmax.f32 %v1211, 0.0
          %v1244 = vmax.f32 %v1212, 0.0
          %v1245 = vmax.f32 %v1213, 0.0
          %v1246 = vmax.f32 %v1214, 0.0
          %v1247 = vmax.f32 %v1215, 0.0
          %v1248 = vmax.f32 %v1216, 0.0
          %v1249 = vmax.f32 %v1217, 0.0
          %v1250 = vmax.f32 %v1218, 0.0
          %v1251 = vmax.f32 %v1219, 0.0
          %v1252 = vmax.f32 %v1220, 0.0
          %v1253 = vmax.f32 %v1221, 0.0
          %v1254 = vmax.f32 %v1222, 0.0
          %v1255 = vmax.f32 %v1223, 0.0
          %v1256 = vmax.f32 %v1224, 0.0
          %vm1257 = vcmask 31744
          %1258 = vst.msk [vmem:[%s315] sm:$0xff] %vm1257, %v1225
          %1259 = vst.msk [vmem:[%s315 + $0x8] sm:$0xff] %vm1257, %v1226
          %1260 = vst.msk [vmem:[%s315 + $0x10] sm:$0xff] %vm1257, %v1227
          %1261 = vst.msk [vmem:[%s315 + $0x18] sm:$0xff] %vm1257, %v1228
          %1262 = vst.msk [vmem:[%s315 + $0x20] sm:$0xff] %vm1257, %v1229
          %1263 = vst.msk [vmem:[%s315 + $0x28] sm:$0xff] %vm1257, %v1230
          %1264 = vst.msk [vmem:[%s315 + $0x30] sm:$0xff] %vm1257, %v1231
          %1265 = vst.msk [vmem:[%s315 + $0x38] sm:$0xff] %vm1257, %v1232
          %1266 = vst.msk [vmem:[%s315 + $0x40] sm:$0xff] %vm1257, %v1233
          %1267 = vst.msk [vmem:[%s315 + $0x48] sm:$0xff] %vm1257, %v1234
          %1268 = vst.msk [vmem:[%s315 + $0x50] sm:$0xff] %vm1257, %v1235
          %1269 = vst.msk [vmem:[%s315 + $0x58] sm:$0xff] %vm1257, %v1236
          %1270 = vst.msk [vmem:[%s315 + $0x60] sm:$0xff] %vm1257, %v1237
          %1271 = vst.msk [vmem:[%s315 + $0x68] sm:$0xff] %vm1257, %v1238
          %1272 = vst.msk [vmem:[%s315 + $0x70] sm:$0xff] %vm1257, %v1239
          %1273 = vst.msk [vmem:[%s315 + $0x78] sm:$0xff] %vm1257, %v1240
          %1274 = vst.msk [vmem:[%s315 + $0x80] sm:$0xff] %vm1257, %v1241
          %1275 = vst.msk [vmem:[%s315 + $0x88] sm:$0xff] %vm1257, %v1242
          %1276 = vst.msk [vmem:[%s315 + $0x90] sm:$0xff] %vm1257, %v1243
          %1277 = vst.msk [vmem:[%s315 + $0x98] sm:$0xff] %vm1257, %v1244
          %1278 = vst.msk [vmem:[%s315 + $0xa0] sm:$0xff] %vm1257, %v1245
          %1279 = vst.msk [vmem:[%s315 + $0xa8] sm:$0xff] %vm1257, %v1246
          %1280 = vst.msk [vmem:[%s315 + $0xb0] sm:$0xff] %vm1257, %v1247
          %1281 = vst.msk [vmem:[%s315 + $0xb8] sm:$0xff] %vm1257, %v1248
          %1282 = vst.msk [vmem:[%s315 + $0xc0] sm:$0xff] %vm1257, %v1249
          %1283 = vst.msk [vmem:[%s315 + $0xc8] sm:$0xff] %vm1257, %v1250
          %1284 = vst.msk [vmem:[%s315 + $0xd0] sm:$0xff] %vm1257, %v1251
          %1285 = vst.msk [vmem:[%s315 + $0xd8] sm:$0xff] %vm1257, %v1252
          %1286 = vst.msk [vmem:[%s315 + $0xe0] sm:$0xff] %vm1257, %v1253
          %1287 = vst.msk [vmem:[%s315 + $0xe8] sm:$0xff] %vm1257, %v1254
          %1288 = vst.msk [vmem:[%s315 + $0xf0] sm:$0xff] %vm1257, %v1255
          %1289 = vst.msk [vmem:[%s315 + $0xf8] sm:$0xff] %vm1257, %v1256
        $region60: #{tpu_custom_call.1} parent=35 // pred_fallthru
          _
        %s1290 = smul.u32 32, %s26
        %p1291 = scmp.lt.s32.totalorder %s25, 2
        %s1292 = scalar_select %p1291, %s25, 2
        %p1293 = scmp.lt.s32.totalorder %s1290, 31
        %s1294 = scalar_select %p1293, %s1290, 31
        %s1295 = smul.addr %s1292, 32
        %s1296 = sadd.s32 %s1294, %s1295
        %s1297 = smul.addr %s1296, 8
        %s1298 = scalar_lea.vmem %s6, %s1297
        // Predicated region
        $region61: #{tpu_custom_call.1} parent=35 // pred_check
          %p1299 = pneg %p161
        $region62: #{tpu_custom_call.1} parent=35 // pred_check_branch
          %1301 = sbr.rel (%p1299) target = $region64
        $region63: #{tpu_custom_call.1} parent=35 // pred_region
          %s1302 = smul.u32 32, %s26
        $region64: #{tpu_custom_call.1} parent=35 // pred_fallthru
          _
      $region36: #{tpu_custom_call.1} parent=5 // pred_fallthru
        _
      %p1303 = scmp.le.s32.totalorder 2, %s15
      // Predicated region
      $region65: #{tpu_custom_call.1} parent=5 // pred_check
        %p1304 = pneg %p1303
      $region66: #{tpu_custom_call.1} parent=5 // pred_check_branch
        %1306 = sbr.rel (%p1304) target = $region68
      $region67: #{tpu_custom_call.1} parent=5 // pred_region
        %s1307 = ssub.s32 %s15, 2
        // Predicated region
        $region69: #{tpu_custom_call.1} parent=67 // pred_check
          %p1308 = pneg %p167
        $region70: #{tpu_custom_call.1} parent=67 // pred_check_branch
          %1310 = sbr.rel (%p1308) target = $region72
        $region71: #{tpu_custom_call.1} parent=67 // pred_region
          %s1311 = smul.u32 32, %s29
          %p1312 = scmp.lt.s32.totalorder %s28, 2
          %s1313 = scalar_select %p1312, %s28, 2
          %p1314 = scmp.lt.s32.totalorder %s1311, 31
          %s1315 = scalar_select %p1314, %s1311, 31
          %s1316 = smul.addr %s1313, 32
          %s1317 = sadd.s32 %s1315, %s1316
          %s1318 = smul.addr %s1317, 8
          %s1319 = scalar_lea.vmem %s6, %s1318
        $region72: #{tpu_custom_call.1} parent=67 // pred_fallthru
          _
      $region68: #{tpu_custom_call.1} parent=5 // pred_fallthru
        _
    $region6: #{tpu_custom_call.1} parent=1 // loop_footer
      %s19 = sadd.s32 1, %s15
    $region7: #{tpu_custom_call.1} parent=1 // loop_footer_branch
      %14 = sbr.rel target = $region3
    $region8: #{tpu_custom_call.1} parent=1 // loop_exit
      _
    %1320 = vsyncpa [#allocation8], 1
    %s1321 = scalar_lea.sflag [#allocation8], 1
    %1322 = vsyncpa %s1321, 1

</llo_original>
